<compile_context>
chip_gen: v7x
topology: tpu7x:2x2x1
jax: 0.10.0
libtpu: 0.0.40
codegen_flags: <defaults>
</compile_context>

<pallas_src>
import jax
import jax.numpy as jnp
from jax.experimental import pallas as pl
from jax.experimental.pallas import tpu as pltpu


# ---------------------------------------------------------------------------
# Kernel 1: Chebyshev conv stack + per-graph sum readout.
# One grid step processes G graphs.
#   l_ref   : (G, N, N)      f32   scaled Laplacians of this group's graphs
#   h_ref   : (G, N, fc2)    f32   embedded node features
#   wcX_ref : (K, Fin, Fout) bf16  Chebyshev weights (constant index_map -> resident)
#   bcX_ref : (1, 1, Fout)   f32
#   o_ref   : (G, 1, 4*fc2)  f32   per-graph sum_nodes readout
# ---------------------------------------------------------------------------
def cheb_conv_kernel(l_ref, h_ref,
                     wc1_ref, bc1_ref, wc2_ref, bc2_ref, wc3_ref, bc3_ref,
                     o_ref):
    L = l_ref[...]                                    # (G, N, N) f32
    h = h_ref[...]                                    # (G, N, fc2) f32
    G, N, _ = h.shape

    def t_mat_w(t, w):
        # (G, N, Fin) f32  x  (Fin, Fout) bf16  ->  (G, N, Fout) f32
        fin = t.shape[-1]
        t2 = t.reshape(G * N, fin).astype(jnp.bfloat16)
        out = jnp.dot(t2, w, preferred_element_type=jnp.float32)
        return out.reshape(G, N, -1)

    def cheb_layer(t0, w_ref, b_ref):
        # Per-order accumulation: acc = sum_k T_k @ W_k  (no lane-axis concat).
        K = w_ref.shape[0]
        acc = t_mat_w(t0, w_ref[0])
        t_prev = t0
        if K > 1:
            t_cur = jnp.einsum('gij,gjf->gif', L, t_prev,          # T1 = L @ T0
                               preferred_element_type=jnp.float32)
            acc = acc + t_mat_w(t_cur, w_ref[1])
            for kk in range(2, K):
                t_next = 2.0 * jnp.einsum('gij,gjf->gif', L, t_cur,
                                          preferred_element_type=jnp.float32) - t_prev
                acc = acc + t_mat_w(t_next, w_ref[kk])
                t_prev, t_cur = t_cur, t_next
        return acc + b_ref[...]                       # (1,1,Fout) broadcasts

    h = cheb_layer(h, wc1_ref, bc1_ref)               # (G, N,   fc2)
    h = cheb_layer(h, wc2_ref, bc2_ref)               # (G, N, 2*fc2)
    h = cheb_layer(h, wc3_ref, bc3_ref)               # (G, N, 4*fc2)

    # dgl.sum_nodes: sublane-sum over the N node rows of each graph (XLU slot).
    o_ref[...] = jnp.sum(h, axis=1, keepdims=True).astype(o_ref.dtype)


# ---------------------------------------------------------------------------
# Kernel 2: MLP applied once on the full (B, 4*fc2) readout.
#   hg_ref: (B, D) f32, w1: (D, D) bf16, b1: (1, D) f32,
#   w2: (D, C) bf16,    b2: (1, C) f32, o_ref: (B, C) f32
# ---------------------------------------------------------------------------
def mlp_kernel(hg_ref, w1_ref, b1_ref, w2_ref, b2_ref, o_ref):
    z = jnp.dot(hg_ref[...].astype(jnp.bfloat16), w1_ref[...],
                preferred_element_type=jnp.float32) + b1_ref[...]
    z = jnp.maximum(z, 0.0)
    out = jnp.dot(z.astype(jnp.bfloat16), w2_ref[...],
                  preferred_element_type=jnp.float32) + b2_ref[...]
    o_ref[...] = out.astype(o_ref.dtype)


# ---------------------------------------------------------------------------
# Glue: Laplacian, embedding, parameters, forward, pure-JAX reference.
# ---------------------------------------------------------------------------
def scaled_laplacian(adj, lambda_max=2.0):
    # adj: (B, N, N) dense symmetric adjacency (no self-loops)
    deg = adj.sum(-1)
    dinv = jnp.where(deg > 0, 1.0 / jnp.sqrt(jnp.maximum(deg, 1e-12)), 0.0)
    a_norm = adj * dinv[..., :, None] * dinv[..., None, :]
    eye = jnp.eye(adj.shape[-1], dtype=adj.dtype)
    L = eye - a_norm
    return (2.0 / lambda_max) * L - eye


def init_params(key, num_atom_type, fc2, n_classes, k):
    dims = [(fc2, fc2), (fc2, 2 * fc2), (2 * fc2, 4 * fc2)]
    keys = jax.random.split(key, 2 + 2 * len(dims) + 4)
    it = iter(keys)
    params = {}
    params["emb"] = 0.1 * jax.random.normal(next(it), (num_atom_type, fc2), jnp.float32)
    convs = []
    for fin, fout in dims:
        w = 0.1 * jax.random.normal(next(it), (k, fin, fout), jnp.float32)
        b = 0.01 * jax.random.normal(next(it), (fout,), jnp.float32)
        convs.append((w, b))
    params["convs"] = convs
    d = 4 * fc2
    params["w1"] = 0.1 * jax.random.normal(next(it), (d, d), jnp.float32)
    params["b1"] = 0.01 * jax.random.normal(next(it), (d,), jnp.float32)
    params["w2"] = 0.1 * jax.random.normal(next(it), (d, n_classes), jnp.float32)
    params["b2"] = 0.01 * jax.random.normal(next(it), (n_classes,), jnp.float32)
    return params


def _pick_graphs_per_step(B, N):
    # Aim for G*N >= 128 rows per step (MXU sublane fill) while dividing B.
    target = max(1, 128 // max(N, 1))
    best = 1
    for g in range(1, min(B, target) + 1):
        if B % g == 0:
            best = g
    return best


def cheb_zinc_forward(params, adj, atom_types, graphs_per_step=None):
    B, N = atom_types.shape
    fc2 = params["emb"].shape[1]
    D = 4 * fc2
    C = params["w2"].shape[1]

    G = graphs_per_step if graphs_per_step is not None else _pick_graphs_per_step(B, N)
    assert B % G == 0, "graphs_per_step must divide batch size"

    # Per-graph scaled Laplacians (no block-diagonal densification).
    l_hat = scaled_laplacian(adj).astype(jnp.float32)                     # (B, N, N)

    # embedding_h(h.long()).squeeze()  (gather kept in JAX glue)
    h0 = jnp.take(params["emb"], atom_types.reshape(-1), axis=0)
    h0 = h0.reshape(B, N, fc2).astype(jnp.float32)                        # (B, N, fc2)

    conv_ws = [w.astype(jnp.bfloat16) for w, _ in params["convs"]]        # (K, Fin, Fout)
    conv_bs = [b.reshape(1, 1, -1).astype(jnp.float32) for _, b in params["convs"]]

    def full_spec(arr):
        nd = arr.ndim
        return pl.BlockSpec(arr.shape, lambda b, _nd=nd: (0,) * _nd)

    # Advisory cost estimate (helps XLA schedule around the gather / Laplacian ops).
    flops = 0
    for w in conv_ws:
        k_, fin, fout = w.shape
        flops += 2 * B * (k_ - 1) * N * N * fin       # L @ T_k recurrence
        flops += 2 * B * N * k_ * fin * fout          # T_k @ W_k
    bytes_accessed = (l_hat.size * 4 + h0.size * 4 + B * D * 4
                      + sum(w.size * 2 for w in conv_ws)
                      + sum(b.size * 4 for b in conv_bs))
    cost = pl.CostEstimate(flops=int(flops), transcendentals=0,
                           bytes_accessed=int(bytes_accessed))

    hg = pl.pallas_call(
        cheb_conv_kernel,
        out_shape=jax.ShapeDtypeStruct((B, 1, D), jnp.float32),
        grid=(B // G,),
        in_specs=[
            pl.BlockSpec((G, N, N), lambda b: (b, 0, 0)),      # per-group Laplacians
            pl.BlockSpec((G, N, fc2), lambda b: (b, 0, 0)),    # per-group features
            full_spec(conv_ws[0]), full_spec(conv_bs[0]),      # resident weights
            full_spec(conv_ws[1]), full_spec(conv_bs[1]),
            full_spec(conv_ws[2]), full_spec(conv_bs[2]),
        ],
        out_specs=pl.BlockSpec((G, 1, D), lambda b: (b, 0, 0)),
        compiler_params=pltpu.CompilerParams(
            dimension_semantics=("parallel",)),
        cost_estimate=cost,
    )(l_hat, h0,
      conv_ws[0], conv_bs[0], conv_ws[1], conv_bs[1], conv_ws[2], conv_bs[2])

    hg = hg.reshape(B, D)

    vmem = pl.BlockSpec(memory_space=pltpu.MemorySpace.VMEM)
    out = pl.pallas_call(
        mlp_kernel,
        out_shape=jax.ShapeDtypeStruct((B, C), jnp.float32),
        in_specs=[vmem] * 5,
        out_specs=vmem,
    )(hg,
      params["w1"].astype(jnp.bfloat16),
      params["b1"].reshape(1, -1).astype(jnp.float32),
      params["w2"].astype(jnp.bfloat16),
      params["b2"].reshape(1, -1).astype(jnp.float32))
    return out


def cheb_zinc_reference(params, adj, atom_types):
    # Pure-JAX reference mirroring the kernel's dtype choices (bf16 weights,
    # f32 Chebyshev recurrence) for a tolerance check.
    B, N = atom_types.shape
    fc2 = params["emb"].shape[1]
    L = scaled_laplacian(adj).astype(jnp.float32)
    h = jnp.take(params["emb"], atom_types.reshape(-1), axis=0).reshape(B, N, fc2)
    h = h.astype(jnp.float32)
    for w, b in params["convs"]:
        K = w.shape[0]
        wb = w.astype(jnp.bfloat16)
        ts = [h]
        if K > 1:
            ts.append(jnp.einsum('gij,gjf->gif', L, h))
            for _ in range(2, K):
                ts.append(2.0 * jnp.einsum('gij,gjf->gif', L, ts[-1]) - ts[-2])
        acc = 0.0
        for kk in range(K):
            acc = acc + jnp.einsum('gnf,fo->gno', ts[kk].astype(jnp.bfloat16), wb[kk],
                                   preferred_element_type=jnp.float32)
        h = acc + b.reshape(1, 1, -1).astype(jnp.float32)
    hg = h.sum(axis=1)                                                   # (B, 4*fc2)
    z = jnp.dot(hg.astype(jnp.bfloat16), params["w1"].astype(jnp.bfloat16),
                preferred_element_type=jnp.float32) + params["b1"]
    z = jnp.maximum(z, 0.0)
    return jnp.dot(z.astype(jnp.bfloat16), params["w2"].astype(jnp.bfloat16),
                   preferred_element_type=jnp.float32) + params["b2"]


if __name__ == "__main__":
    # Small shapes: 4 graphs of 16 nodes, fc2=32, k=3, ZINC regression (1 output).
    B, N = 4, 16
    num_atom_type, fc2, n_classes, k = 28, 32, 1, 3

    key = jax.random.PRNGKey(0)
    k_params, k_atoms, k_adj = jax.random.split(key, 3)

    params = init_params(k_params, num_atom_type, fc2, n_classes, k)

    atom_types = jax.random.randint(k_atoms, (B, N), 0, num_atom_type, dtype=jnp.int32)

    rand = jax.random.uniform(k_adj, (B, N, N))
    adj = ((rand + jnp.swapaxes(rand, -1, -2)) > 1.2).astype(jnp.float32)
    adj = adj * (1.0 - jnp.eye(N, dtype=jnp.float32))   # symmetric, no self-loops

    # graphs_per_step=2 -> grid=(2,), exercising the pipelined multi-step path.
    fwd = jax.jit(lambda p, a, t: cheb_zinc_forward(p, a, t, graphs_per_step=2))
    out = jax.block_until_ready(fwd(params, adj, atom_types))
    assert out.shape == (B, n_classes)
    assert jnp.all(jnp.isfinite(out))

    with jax.default_matmul_precision("highest"):
        ref = jax.block_until_ready(cheb_zinc_reference(params, adj, atom_types))
    assert jnp.allclose(out, ref, rtol=5e-2, atol=5e-2), (
        f"max abs diff {jnp.max(jnp.abs(out - ref))}")

    print("KERNEL_OK")
</pallas_src>

<mosaic_0001>
module attributes {stable_mosaic.version = 11 : i64} {
  func.func @mlp_kernel(%arg0: memref<4x128xf32, #tpu.memory_space<vmem>>, %arg1: memref<128x128xbf16, #tpu.memory_space<vmem>>, %arg2: memref<1x128xf32, #tpu.memory_space<vmem>>, %arg3: memref<128x1xbf16, #tpu.memory_space<vmem>>, %arg4: memref<1x1xf32, #tpu.memory_space<vmem>>, %arg5: memref<4x1xf32, #tpu.memory_space<vmem>>) attributes {dimension_semantics = [], scalar_prefetch = 0 : i64, scratch_operands = 0 : i64, tpu.core_type = #tpu.core_type<tc>} {
    %c0 = arith.constant 0 : index
    %c0_0 = arith.constant 0 : index
    %0 = vector.load %arg0[%c0, %c0_0] : memref<4x128xf32, #tpu.memory_space<vmem>>, vector<4x128xf32>
    %1 = arith.truncf %0 : vector<4x128xf32> to vector<4x128xbf16>
    %c0_1 = arith.constant 0 : index
    %c0_2 = arith.constant 0 : index
    %2 = vector.load %arg1[%c0_1, %c0_2] : memref<128x128xbf16, #tpu.memory_space<vmem>>, vector<128x128xbf16>
    %cst = arith.constant dense<0.000000e+00> : vector<4x128xf32>
    %3 = tpu.matmul %1, %2, %cst {dimension_numbers = #tpu.dot_dimension_numbers<[1], [0], [0], [1], [0, 0, 1, 1], [], []>} : vector<4x128xbf16>, vector<128x128xbf16>, vector<4x128xf32> -> vector<4x128xf32>
    %c0_3 = arith.constant 0 : index
    %c0_4 = arith.constant 0 : index
    %4 = vector.load %arg2[%c0_3, %c0_4] : memref<1x128xf32, #tpu.memory_space<vmem>>, vector<1x128xf32>
    %5 = vector.broadcast %4 : vector<1x128xf32> to vector<4x128xf32>
    %6 = arith.addf %3, %5 : vector<4x128xf32>
    %cst_5 = arith.constant 0.000000e+00 : f32
    %7 = vector.broadcast %cst_5 : f32 to vector<4x128xf32>
    %8 = arith.maximumf %6, %7 : vector<4x128xf32>
    %9 = arith.truncf %8 : vector<4x128xf32> to vector<4x128xbf16>
    %c0_6 = arith.constant 0 : index
    %c0_7 = arith.constant 0 : index
    %10 = vector.load %arg3[%c0_6, %c0_7] : memref<128x1xbf16, #tpu.memory_space<vmem>>, vector<128x1xbf16>
    %cst_8 = arith.constant dense<0.000000e+00> : vector<4x1xf32>
    %11 = tpu.matmul %9, %10, %cst_8 {dimension_numbers = #tpu.dot_dimension_numbers<[1], [0], [0], [1], [0, 0, 1, 1], [], []>} : vector<4x128xbf16>, vector<128x1xbf16>, vector<4x1xf32> -> vector<4x1xf32>
    %c0_9 = arith.constant 0 : index
    %c0_10 = arith.constant 0 : index
    %12 = vector.load %arg4[%c0_9, %c0_10] : memref<1x1xf32, #tpu.memory_space<vmem>>, vector<1x1xf32>
    %13 = vector.broadcast %12 : vector<1x1xf32> to vector<4x1xf32>
    %14 = arith.addf %11, %13 : vector<4x1xf32>
    %c0_11 = arith.constant 0 : index
    %c0_12 = arith.constant 0 : index
    %15 = vector.load %arg5[%c0_11, %c0_12] : memref<4x1xf32, #tpu.memory_space<vmem>>, vector<4x1xf32>
    tpu.vector_store %arg5[%c0_11, %c0_12], %14 {strides = array<i32>} : memref<4x1xf32, #tpu.memory_space<vmem>>, vector<4x1xf32>,
    return
  }
}

module attributes {stable_mosaic.version = 11 : i64} {
  func.func @cheb_conv_kernel(%arg0: i32, %arg1: memref<2x16x16xf32, #tpu.memory_space<vmem>>, %arg2: memref<2x16x32xf32, #tpu.memory_space<vmem>>, %arg3: memref<3x32x32xbf16, #tpu.memory_space<vmem>>, %arg4: memref<1x1x32xf32, #tpu.memory_space<vmem>>, %arg5: memref<3x32x64xbf16, #tpu.memory_space<vmem>>, %arg6: memref<1x1x64xf32, #tpu.memory_space<vmem>>, %arg7: memref<3x64x128xbf16, #tpu.memory_space<vmem>>, %arg8: memref<1x1x128xf32, #tpu.memory_space<vmem>>, %arg9: memref<2x1x128xf32, #tpu.memory_space<vmem>>) attributes {dimension_semantics = [#tpu.dimension_semantics<parallel>], iteration_bounds = array<i64: 2>, scalar_prefetch = 0 : i64, scratch_operands = 0 : i64, tpu.core_type = #tpu.core_type<tc>, window_params = [{transform_indices = @transform_0, window_bounds = array<i64: 2, 16, 16>}, {transform_indices = @transform_1, window_bounds = array<i64: 2, 16, 32>}, {pipeline_mode = #tpu.pipeline_mode<synchronous>, transform_indices = @transform_2, window_bounds = array<i64: 3, 32, 32>}, {pipeline_mode = #tpu.pipeline_mode<synchronous>, transform_indices = @transform_3, window_bounds = array<i64: 1, 1, 32>}, {pipeline_mode = #tpu.pipeline_mode<synchronous>, transform_indices = @transform_4, window_bounds = array<i64: 3, 32, 64>}, {pipeline_mode = #tpu.pipeline_mode<synchronous>, transform_indices = @transform_5, window_bounds = array<i64: 1, 1, 64>}, {pipeline_mode = #tpu.pipeline_mode<synchronous>, transform_indices = @transform_6, window_bounds = array<i64: 3, 64, 128>}, {pipeline_mode = #tpu.pipeline_mode<synchronous>, transform_indices = @transform_7, window_bounds = array<i64: 1, 1, 128>}, {transform_indices = @transform_8, window_bounds = array<i64: 2, 1, 128>}]} {
    %c0 = arith.constant 0 : index
    %c0_0 = arith.constant 0 : index
    %c0_1 = arith.constant 0 : index
    %0 = vector.load %arg1[%c0, %c0_0, %c0_1] : memref<2x16x16xf32, #tpu.memory_space<vmem>>, vector<2x16x16xf32>
    %c0_2 = arith.constant 0 : index
    %c0_3 = arith.constant 0 : index
    %c0_4 = arith.constant 0 : index
    %1 = vector.load %arg2[%c0_2, %c0_3, %c0_4] : memref<2x16x32xf32, #tpu.memory_space<vmem>>, vector<2x16x32xf32>
    %c0_5 = arith.constant 0 : index
    %c0_6 = arith.constant 0 : index
    %c0_7 = arith.constant 0 : index
    %2 = vector.load %arg3[%c0_5, %c0_6, %c0_7] : memref<3x32x32xbf16, #tpu.memory_space<vmem>>, vector<1x32x32xbf16>
    %3 = vector.shape_cast %2 : vector<1x32x32xbf16> to vector<32x32xbf16>
    %4 = vector.shape_cast %1 : vector<2x16x32xf32> to vector<32x32xf32>
    %5 = arith.truncf %4 : vector<32x32xf32> to vector<32x32xbf16>
    %cst = arith.constant dense<0.000000e+00> : vector<32x32xf32>
    %6 = tpu.matmul %5, %3, %cst {dimension_numbers = #tpu.dot_dimension_numbers<[1], [0], [0], [1], [0, 0, 1, 1], [], []>} : vector<32x32xbf16>, vector<32x32xbf16>, vector<32x32xf32> -> vector<32x32xf32>
    %7 = vector.shape_cast %6 : vector<32x32xf32> to vector<2x16x32xf32>
    "tpu.trace_start"() <{level = 10 : i32, message = "gij,gjf->gif"}> : () -> ()
    %cst_8 = arith.constant dense<0.000000e+00> : vector<2x16x32xf32>
    %8 = tpu.matmul %0, %1, %cst_8 {dimension_numbers = #tpu.dot_dimension_numbers<[2], [1], [1], [2], [0, 0, 0, 1, 1, 2], [0], [0]>} : vector<2x16x16xf32>, vector<2x16x32xf32>, vector<2x16x32xf32> -> vector<2x16x32xf32>
    "tpu.trace_stop"() : () -> ()
    %c1 = arith.constant 1 : index
    %c0_9 = arith.constant 0 : index
    %c0_10 = arith.constant 0 : index
    %9 = vector.load %arg3[%c1, %c0_9, %c0_10] : memref<3x32x32xbf16, #tpu.memory_space<vmem>>, vector<1x32x32xbf16>
    %10 = vector.shape_cast %9 : vector<1x32x32xbf16> to vector<32x32xbf16>
    %11 = vector.shape_cast %8 : vector<2x16x32xf32> to vector<32x32xf32>
    %12 = arith.truncf %11 : vector<32x32xf32> to vector<32x32xbf16>
    %cst_11 = arith.constant dense<0.000000e+00> : vector<32x32xf32>
    %13 = tpu.matmul %12, %10, %cst_11 {dimension_numbers = #tpu.dot_dimension_numbers<[1], [0], [0], [1], [0, 0, 1, 1], [], []>} : vector<32x32xbf16>, vector<32x32xbf16>, vector<32x32xf32> -> vector<32x32xf32>
    %14 = vector.shape_cast %13 : vector<32x32xf32> to vector<2x16x32xf32>
    %15 = arith.addf %7, %14 : vector<2x16x32xf32>
    "tpu.trace_start"() <{level = 10 : i32, message = "gij,gjf->gif"}> : () -> ()
    %cst_12 = arith.constant dense<0.000000e+00> : vector<2x16x32xf32>
    %16 = tpu.matmul %0, %8, %cst_12 {dimension_numbers = #tpu.dot_dimension_numbers<[2], [1], [1], [2], [0, 0, 0, 1, 1, 2], [0], [0]>} : vector<2x16x16xf32>, vector<2x16x32xf32>, vector<2x16x32xf32> -> vector<2x16x32xf32>
    "tpu.trace_stop"() : () -> ()
    %cst_13 = arith.constant 2.000000e+00 : f32
    %17 = vector.broadcast %cst_13 : f32 to vector<2x16x32xf32>
    %18 = arith.mulf %17, %16 : vector<2x16x32xf32>
    %19 = arith.subf %18, %1 : vector<2x16x32xf32>
    %c2 = arith.constant 2 : index
    %c0_14 = arith.constant 0 : index
    %c0_15 = arith.constant 0 : index
    %20 = vector.load %arg3[%c2, %c0_14, %c0_15] : memref<3x32x32xbf16, #tpu.memory_space<vmem>>, vector<1x32x32xbf16>
    %21 = vector.shape_cast %20 : vector<1x32x32xbf16> to vector<32x32xbf16>
    %22 = vector.shape_cast %19 : vector<2x16x32xf32> to vector<32x32xf32>
    %23 = arith.truncf %22 : vector<32x32xf32> to vector<32x32xbf16>
    %cst_16 = arith.constant dense<0.000000e+00> : vector<32x32xf32>
    %24 = tpu.matmul %23, %21, %cst_16 {dimension_numbers = #tpu.dot_dimension_numbers<[1], [0], [0], [1], [0, 0, 1, 1], [], []>} : vector<32x32xbf16>, vector<32x32xbf16>, vector<32x32xf32> -> vector<32x32xf32>
    %25 = vector.shape_cast %24 : vector<32x32xf32> to vector<2x16x32xf32>
    %26 = arith.addf %15, %25 : vector<2x16x32xf32>
    %c0_17 = arith.constant 0 : index
    %c0_18 = arith.constant 0 : index
    %c0_19 = arith.constant 0 : index
    %27 = vector.load %arg4[%c0_17, %c0_18, %c0_19] : memref<1x1x32xf32, #tpu.memory_space<vmem>>, vector<1x1x32xf32>
    %28 = vector.broadcast %27 : vector<1x1x32xf32> to vector<2x16x32xf32>
    %29 = arith.addf %26, %28 : vector<2x16x32xf32>
    %c0_20 = arith.constant 0 : index
    %c0_21 = arith.constant 0 : index
    %c0_22 = arith.constant 0 : index
    %30 = vector.load %arg5[%c0_20, %c0_21, %c0_22] : memref<3x32x64xbf16, #tpu.memory_space<vmem>>, vector<1x32x64xbf16>
    %31 = vector.shape_cast %30 : vector<1x32x64xbf16> to vector<32x64xbf16>
    %32 = vector.shape_cast %29 : vector<2x16x32xf32> to vector<32x32xf32>
    %33 = arith.truncf %32 : vector<32x32xf32> to vector<32x32xbf16>
    %cst_23 = arith.constant dense<0.000000e+00> : vector<32x64xf32>
    %34 = tpu.matmul %33, %31, %cst_23 {dimension_numbers = #tpu.dot_dimension_numbers<[1], [0], [0], [1], [0, 0, 1, 1], [], []>} : vector<32x32xbf16>, vector<32x64xbf16>, vector<32x64xf32> -> vector<32x64xf32>
    %35 = vector.shape_cast %34 : vector<32x64xf32> to vector<2x16x64xf32>
    "tpu.trace_start"() <{level = 10 : i32, message = "gij,gjf->gif"}> : () -> ()
    %cst_24 = arith.constant dense<0.000000e+00> : vector<2x16x32xf32>
    %36 = tpu.matmul %0, %29, %cst_24 {dimension_numbers = #tpu.dot_dimension_numbers<[2], [1], [1], [2], [0, 0, 0, 1, 1, 2], [0], [0]>} : vector<2x16x16xf32>, vector<2x16x32xf32>, vector<2x16x32xf32> -> vector<2x16x32xf32>
    "tpu.trace_stop"() : () -> ()
    %c1_25 = arith.constant 1 : index
    %c0_26 = arith.constant 0 : index
    %c0_27 = arith.constant 0 : index
    %37 = vector.load %arg5[%c1_25, %c0_26, %c0_27] : memref<3x32x64xbf16, #tpu.memory_space<vmem>>, vector<1x32x64xbf16>
    %38 = vector.shape_cast %37 : vector<1x32x64xbf16> to vector<32x64xbf16>
    %39 = vector.shape_cast %36 : vector<2x16x32xf32> to vector<32x32xf32>
    %40 = arith.truncf %39 : vector<32x32xf32> to vector<32x32xbf16>
    %cst_28 = arith.constant dense<0.000000e+00> : vector<32x64xf32>
    %41 = tpu.matmul %40, %38, %cst_28 {dimension_numbers = #tpu.dot_dimension_numbers<[1], [0], [0], [1], [0, 0, 1, 1], [], []>} : vector<32x32xbf16>, vector<32x64xbf16>, vector<32x64xf32> -> vector<32x64xf32>
    %42 = vector.shape_cast %41 : vector<32x64xf32> to vector<2x16x64xf32>
    %43 = arith.addf %35, %42 : vector<2x16x64xf32>
    "tpu.trace_start"() <{level = 10 : i32, message = "gij,gjf->gif"}> : () -> ()
    %cst_29 = arith.constant dense<0.000000e+00> : vector<2x16x32xf32>
    %44 = tpu.matmul %0, %36, %cst_29 {dimension_numbers = #tpu.dot_dimension_numbers<[2], [1], [1], [2], [0, 0, 0, 1, 1, 2], [0], [0]>} : vector<2x16x16xf32>, vector<2x16x32xf32>, vector<2x16x32xf32> -> vector<2x16x32xf32>
    "tpu.trace_stop"() : () -> ()
    %cst_30 = arith.constant 2.000000e+00 : f32
    %45 = vector.broadcast %cst_30 : f32 to vector<2x16x32xf32>
    %46 = arith.mulf %45, %44 : vector<2x16x32xf32>
    %47 = arith.subf %46, %29 : vector<2x16x32xf32>
    %c2_31 = arith.constant 2 : index
    %c0_32 = arith.constant 0 : index
    %c0_33 = arith.constant 0 : index
    %48 = vector.load %arg5[%c2_31, %c0_32, %c0_33] : memref<3x32x64xbf16, #tpu.memory_space<vmem>>, vector<1x32x64xbf16>
    %49 = vector.shape_cast %48 : vector<1x32x64xbf16> to vector<32x64xbf16>
    %50 = vector.shape_cast %47 : vector<2x16x32xf32> to vector<32x32xf32>
    %51 = arith.truncf %50 : vector<32x32xf32> to vector<32x32xbf16>
    %cst_34 = arith.constant dense<0.000000e+00> : vector<32x64xf32>
    %52 = tpu.matmul %51, %49, %cst_34 {dimension_numbers = #tpu.dot_dimension_numbers<[1], [0], [0], [1], [0, 0, 1, 1], [], []>} : vector<32x32xbf16>, vector<32x64xbf16>, vector<32x64xf32> -> vector<32x64xf32>
    %53 = vector.shape_cast %52 : vector<32x64xf32> to vector<2x16x64xf32>
    %54 = arith.addf %43, %53 : vector<2x16x64xf32>
    %c0_35 = arith.constant 0 : index
    %c0_36 = arith.constant 0 : index
    %c0_37 = arith.constant 0 : index
    %55 = vector.load %arg6[%c0_35, %c0_36, %c0_37] : memref<1x1x64xf32, #tpu.memory_space<vmem>>, vector<1x1x64xf32>
    %56 = vector.broadcast %55 : vector<1x1x64xf32> to vector<2x16x64xf32>
    %57 = arith.addf %54, %56 : vector<2x16x64xf32>
    %c0_38 = arith.constant 0 : index
    %c0_39 = arith.constant 0 : index
    %c0_40 = arith.constant 0 : index
    %58 = vector.load %arg7[%c0_38, %c0_39, %c0_40] : memref<3x64x128xbf16, #tpu.memory_space<vmem>>, vector<1x64x128xbf16>
    %59 = vector.shape_cast %58 : vector<1x64x128xbf16> to vector<64x128xbf16>
    %60 = vector.shape_cast %57 : vector<2x16x64xf32> to vector<32x64xf32>
    %61 = arith.truncf %60 : vector<32x64xf32> to vector<32x64xbf16>
    %cst_41 = arith.constant dense<0.000000e+00> : vector<32x128xf32>
    %62 = tpu.matmul %61, %59, %cst_41 {dimension_numbers = #tpu.dot_dimension_numbers<[1], [0], [0], [1], [0, 0, 1, 1], [], []>} : vector<32x64xbf16>, vector<64x128xbf16>, vector<32x128xf32> -> vector<32x128xf32>
    %63 = vector.shape_cast %62 : vector<32x128xf32> to vector<2x16x128xf32>
    "tpu.trace_start"() <{level = 10 : i32, message = "gij,gjf->gif"}> : () -> ()
    %cst_42 = arith.constant dense<0.000000e+00> : vector<2x16x64xf32>
    %64 = tpu.matmul %0, %57, %cst_42 {dimension_numbers = #tpu.dot_dimension_numbers<[2], [1], [1], [2], [0, 0, 0, 1, 1, 2], [0], [0]>} : vector<2x16x16xf32>, vector<2x16x64xf32>, vector<2x16x64xf32> -> vector<2x16x64xf32>
    "tpu.trace_stop"() : () -> ()
    %c1_43 = arith.constant 1 : index
    %c0_44 = arith.constant 0 : index
    %c0_45 = arith.constant 0 : index
    %65 = vector.load %arg7[%c1_43, %c0_44, %c0_45] : memref<3x64x128xbf16, #tpu.memory_space<vmem>>, vector<1x64x128xbf16>
    %66 = vector.shape_cast %65 : vector<1x64x128xbf16> to vector<64x128xbf16>
    %67 = vector.shape_cast %64 : vector<2x16x64xf32> to vector<32x64xf32>
    %68 = arith.truncf %67 : vector<32x64xf32> to vector<32x64xbf16>
    %cst_46 = arith.constant dense<0.000000e+00> : vector<32x128xf32>
    %69 = tpu.matmul %68, %66, %cst_46 {dimension_numbers = #tpu.dot_dimension_numbers<[1], [0], [0], [1], [0, 0, 1, 1], [], []>} : vector<32x64xbf16>, vector<64x128xbf16>, vector<32x128xf32> -> vector<32x128xf32>
    %70 = vector.shape_cast %69 : vector<32x128xf32> to vector<2x16x128xf32>
    %71 = arith.addf %63, %70 : vector<2x16x128xf32>
    "tpu.trace_start"() <{level = 10 : i32, message = "gij,gjf->gif"}> : () -> ()
    %cst_47 = arith.constant dense<0.000000e+00> : vector<2x16x64xf32>
    %72 = tpu.matmul %0, %64, %cst_47 {dimension_numbers = #tpu.dot_dimension_numbers<[2], [1], [1], [2], [0, 0, 0, 1, 1, 2], [0], [0]>} : vector<2x16x16xf32>, vector<2x16x64xf32>, vector<2x16x64xf32> -> vector<2x16x64xf32>
    "tpu.trace_stop"() : () -> ()
    %cst_48 = arith.constant 2.000000e+00 : f32
    %73 = vector.broadcast %cst_48 : f32 to vector<2x16x64xf32>
    %74 = arith.mulf %73, %72 : vector<2x16x64xf32>
    %75 = arith.subf %74, %57 : vector<2x16x64xf32>
    %c2_49 = arith.constant 2 : index
    %c0_50 = arith.constant 0 : index
    %c0_51 = arith.constant 0 : index
    %76 = vector.load %arg7[%c2_49, %c0_50, %c0_51] : memref<3x64x128xbf16, #tpu.memory_space<vmem>>, vector<1x64x128xbf16>
    %77 = vector.shape_cast %76 : vector<1x64x128xbf16> to vector<64x128xbf16>
    %78 = vector.shape_cast %75 : vector<2x16x64xf32> to vector<32x64xf32>
    %79 = arith.truncf %78 : vector<32x64xf32> to vector<32x64xbf16>
    %cst_52 = arith.constant dense<0.000000e+00> : vector<32x128xf32>
    %80 = tpu.matmul %79, %77, %cst_52 {dimension_numbers = #tpu.dot_dimension_numbers<[1], [0], [0], [1], [0, 0, 1, 1], [], []>} : vector<32x64xbf16>, vector<64x128xbf16>, vector<32x128xf32> -> vector<32x128xf32>
    %81 = vector.shape_cast %80 : vector<32x128xf32> to vector<2x16x128xf32>
    %82 = arith.addf %71, %81 : vector<2x16x128xf32>
    %c0_53 = arith.constant 0 : index
    %c0_54 = arith.constant 0 : index
    %c0_55 = arith.constant 0 : index
    %83 = vector.load %arg8[%c0_53, %c0_54, %c0_55] : memref<1x1x128xf32, #tpu.memory_space<vmem>>, vector<1x1x128xf32>
    %84 = vector.broadcast %83 : vector<1x1x128xf32> to vector<2x16x128xf32>
    %85 = arith.addf %82, %84 : vector<2x16x128xf32>
    %cst_56 = arith.constant dense<0.000000e+00> : vector<2x128xf32>
    %86 = vector.multi_reduction <add>, %85, %cst_56 [1] : vector<2x16x128xf32> to vector<2x128xf32>
    %87 = vector.shape_cast %86 : vector<2x128xf32> to vector<2x1x128xf32>
    %c0_57 = arith.constant 0 : index
    %c0_58 = arith.constant 0 : index
    %c0_59 = arith.constant 0 : index
    %88 = vector.load %arg9[%c0_57, %c0_58, %c0_59] : memref<2x1x128xf32, #tpu.memory_space<vmem>>, vector<2x1x128xf32>
    tpu.vector_store %arg9[%c0_57, %c0_58, %c0_59], %87 {strides = array<i32>} : memref<2x1x128xf32, #tpu.memory_space<vmem>>, vector<2x1x128xf32>,
    return
  }
  func.func @transform_0(%arg0: i32) -> (i32, i32, i32) {
    %c0_i32 = arith.constant 0 : i32
    %c0_i32_0 = arith.constant 0 : i32
    %c0_i32_1 = arith.constant 0 : i32
    return %arg0, %c0_i32, %c0_i32_0 : i32, i32, i32
  }
  func.func @transform_1(%arg0: i32) -> (i32, i32, i32) {
    %c0_i32 = arith.constant 0 : i32
    %c0_i32_0 = arith.constant 0 : i32
    %c0_i32_1 = arith.constant 0 : i32
    return %arg0, %c0_i32, %c0_i32_0 : i32, i32, i32
  }
  func.func @transform_2(%arg0: i32) -> (i32, i32, i32) {
    %c0_i32 = arith.constant 0 : i32
    %c0_i32_0 = arith.constant 0 : i32
    %c0_i32_1 = arith.constant 0 : i32
    %c0_i32_2 = arith.constant 0 : i32
    return %c0_i32, %c0_i32_0, %c0_i32_1 : i32, i32, i32
  }
  func.func @transform_3(%arg0: i32) -> (i32, i32, i32) {
    %c0_i32 = arith.constant 0 : i32
    %c0_i32_0 = arith.constant 0 : i32
    %c0_i32_1 = arith.constant 0 : i32
    %c0_i32_2 = arith.constant 0 : i32
    return %c0_i32, %c0_i32_0, %c0_i32_1 : i32, i32, i32
  }
  func.func @transform_4(%arg0: i32) -> (i32, i32, i32) {
    %c0_i32 = arith.constant 0 : i32
    %c0_i32_0 = arith.constant 0 : i32
    %c0_i32_1 = arith.constant 0 : i32
    %c0_i32_2 = arith.constant 0 : i32
    return %c0_i32, %c0_i32_0, %c0_i32_1 : i32, i32, i32
  }
  func.func @transform_5(%arg0: i32) -> (i32, i32, i32) {
    %c0_i32 = arith.constant 0 : i32
    %c0_i32_0 = arith.constant 0 : i32
    %c0_i32_1 = arith.constant 0 : i32
    %c0_i32_2 = arith.constant 0 : i32
    return %c0_i32, %c0_i32_0, %c0_i32_1 : i32, i32, i32
  }
  func.func @transform_6(%arg0: i32) -> (i32, i32, i32) {
    %c0_i32 = arith.constant 0 : i32
    %c0_i32_0 = arith.constant 0 : i32
    %c0_i32_1 = arith.constant 0 : i32
    %c0_i32_2 = arith.constant 0 : i32
    return %c0_i32, %c0_i32_0, %c0_i32_1 : i32, i32, i32
  }
  func.func @transform_7(%arg0: i32) -> (i32, i32, i32) {
    %c0_i32 = arith.constant 0 : i32
    %c0_i32_0 = arith.constant 0 : i32
    %c0_i32_1 = arith.constant 0 : i32
    %c0_i32_2 = arith.constant 0 : i32
    return %c0_i32, %c0_i32_0, %c0_i32_1 : i32, i32, i32
  }
  func.func @transform_8(%arg0: i32) -> (i32, i32, i32) {
    %c0_i32 = arith.constant 0 : i32
    %c0_i32_0 = arith.constant 0 : i32
    %c0_i32_1 = arith.constant 0 : i32
    return %arg0, %c0_i32, %c0_i32_0 : i32, i32, i32
  }
}

</mosaic_0001>

<llo_original>
// kernel: _lambda_.3
$region0: #{_lambda_.3}
  #allocation0 [shape = 'u32[]', space=smem, size = 0x4, offset = 0x4, fixed_abs, tag = 'smem constant byte address 0x4 - core index']
  #allocation1 [shape = 'u32[144,128]{1,0:T(1,128)}', space=vmem, size = 0x12000, scoped, tag = 'internal scratch']
  #allocation2 [shape = 'f32[1,1]{1,0:T(1,128)S(1)}', space=vmem, size = 0x200, scoped, tag = 'scoped memory for _lambda_.3']
  %s0 = inlined_call_operand.vmem [shape: f32[4,128], index: 0, kind: input, shape index: {}]
  %s1 = inlined_call_operand.vmem [shape: bf16[128,128], index: 1, kind: input, shape index: {}]
  %s2 = inlined_call_operand.vmem [shape: f32[1,128], index: 2, kind: input, shape index: {}]
  %s3 = inlined_call_operand.vmem [shape: bf16[128,1], index: 3, kind: input, shape index: {}]
  %s4 = inlined_call_operand.<no memory space> [shape: f32[1,1], index: 4, kind: input, shape index: {}]
  %s5 = inlined_call_operand.vmem [shape: f32[4,1], index: 5, kind: output, shape index: {}]
  %s6 = sld [smem:[#allocation0]]
  $region30: #{_lambda_.3} parent=0
    _
  %s8 = ssub.s32 1, %s6
  %s9 = scalar_select 0, %s8, %s6
  %v10 = vstv %s4
  %11 = vst [vmem:[#allocation2] sm:$0x1] %v10
  // Predicated region
  $region2: #{_lambda_.3} parent=0 // pred_check
    _
  $region3: #{_lambda_.3} parent=0 // pred_check_branch
    %13 = sbr.rel (0) target = $region5
  $region4: #{_lambda_.3} parent=0 // pred_region
    _
  $region5: #{_lambda_.3} parent=0 // pred_fallthru
    _
  // Predicated region
  $region6: #{_lambda_.3} parent=0 // pred_check
    _
  $region7: #{_lambda_.3} parent=0 // pred_check_branch
    %15 = sbr.rel (0) target = $region9
  $region8: #{_lambda_.3} parent=0 // pred_region
    _
  $region9: #{_lambda_.3} parent=0 // pred_fallthru
    _
  // Predicated region
  $region10: #{_lambda_.3} parent=0 // pred_check
    _
  $region11: #{_lambda_.3} parent=0 // pred_check_branch
    %17 = sbr.rel (0) target = $region13
  $region12: #{_lambda_.3} parent=0 // pred_region
    _
  $region13: #{_lambda_.3} parent=0 // pred_fallthru
    _
  // Predicated region
  $region14: #{_lambda_.3} parent=0 // pred_check
    _
  $region15: #{_lambda_.3} parent=0 // pred_check_branch
    %19 = sbr.rel (0) target = $region17
  $region16: #{_lambda_.3} parent=0 // pred_region
    _
  $region17: #{_lambda_.3} parent=0 // pred_fallthru
    _
  // Predicated region
  $region18: #{_lambda_.3} parent=0 // pred_check
    _
  $region19: #{_lambda_.3} parent=0 // pred_check_branch
    %21 = sbr.rel (0) target = $region21
  $region20: #{_lambda_.3} parent=0 // pred_region
    _
  $region21: #{_lambda_.3} parent=0 // pred_fallthru
    _
  %v23 = vld [vmem:[%s0] sm:$0xf]
  %v24 = vpack.c.bf16 %v23, %v23
  %v25 = vld [vmem:[%s1] sm:$0xf]
  %v26 = vld [vmem:[%s1 + $0x4] sm:$0xf]
  %v27 = vld [vmem:[%s1 + $0x8] sm:$0xf]
  %v28 = vld [vmem:[%s1 + $0xc] sm:$0xf]
  %v29 = vld [vmem:[%s1 + $0x10] sm:$0xf]
  %v30 = vld [vmem:[%s1 + $0x14] sm:$0xf]
  %v31 = vld [vmem:[%s1 + $0x18] sm:$0xf]
  %v32 = vld [vmem:[%s1 + $0x1c] sm:$0xf]
  %v33 = vld [vmem:[%s1 + $0x20] sm:$0xf]
  %v34 = vld [vmem:[%s1 + $0x24] sm:$0xf]
  %v35 = vld [vmem:[%s1 + $0x28] sm:$0xf]
  %v36 = vld [vmem:[%s1 + $0x2c] sm:$0xf]
  %v37 = vld [vmem:[%s1 + $0x30] sm:$0xf]
  %v38 = vld [vmem:[%s1 + $0x34] sm:$0xf]
  %v39 = vld [vmem:[%s1 + $0x38] sm:$0xf]
  %v40 = vld [vmem:[%s1 + $0x3c] sm:$0xf]
  %v41 = vld [vmem:[%s2] sm:$0x1]
  %v43 = vlaneseq
  %v44 = vshrl.u32 %v43, 7
  %v45 = vsub.s32 0, %v44
  %v46 = vrot.slane %v41, %v45
  %v64 = vunpack.c.l.b16 %v25
  %v65 = vunpack.c.l.b16 %v26
  %v66 = vunpack.c.l.b16 %v27
  %v67 = vunpack.c.l.b16 %v28
  %v68 = vunpack.c.l.b16 %v29
  %v69 = vunpack.c.l.b16 %v30
  %v70 = vunpack.c.l.b16 %v31
  %v71 = vunpack.c.l.b16 %v32
  %v72 = vunpack.c.l.b16 %v33
  %v73 = vunpack.c.l.b16 %v34
  %v74 = vunpack.c.l.b16 %v35
  %v75 = vunpack.c.l.b16 %v36
  %v76 = vunpack.c.l.b16 %v37
  %v77 = vunpack.c.l.b16 %v38
  %v78 = vunpack.c.l.b16 %v39
  %v79 = vunpack.c.l.b16 %v40
  %v80 = vpack.c.b16 %v65, %v64
  %v81 = vpack.c.b16 %v67, %v66
  %v82 = vpack.c.b16 %v69, %v68
  %v83 = vpack.c.b16 %v71, %v70
  %v84 = vpack.c.b16 %v73, %v72
  %v85 = vpack.c.b16 %v75, %v74
  %v86 = vpack.c.b16 %v77, %v76
  %v87 = vpack.c.b16 %v79, %v78
  %96 = vmatprep.subr.bf16.mxu0 0
  %97 = vmatpush1.bf16.msra.mxu0 %v80
  %98 = vmatprep.subr.bf16.mxu0 0
  %99 = vmatpush1.bf16.msra.mxu0 %v81
  %100 = vmatprep.subr.bf16.mxu0 0
  %101 = vmatpush1.bf16.msra.mxu0 %v82
  %102 = vmatprep.subr.bf16.mxu0 0
  %103 = vmatpush1.bf16.msra.mxu0 %v83
  %104 = vmatprep.subr.bf16.mxu0 0
  %105 = vmatpush1.bf16.msra.mxu0 %v84
  %106 = vmatprep.subr.bf16.mxu0 0
  %107 = vmatpush1.bf16.msra.mxu0 %v85
  %108 = vmatprep.subr.bf16.mxu0 0
  %109 = vmatpush1.bf16.msra.mxu0 %v86
  %110 = vmatprep.subr.bf16.mxu0 0
  %111 = vmatpush1.bf16.msra.mxu0 %v87
  %112 = vmatprep.subr.bf16.mxu0 0
  %113 = vmatpush1.bf16.msra.mxu0 0
  %114 = vmatprep.subr.bf16.mxu0 0
  %115 = vmatpush1.bf16.msra.mxu0 0
  %116 = vmatprep.subr.bf16.mxu0 0
  %117 = vmatpush1.bf16.msra.mxu0 0
  %118 = vmatprep.subr.bf16.mxu0 0
  %119 = vmatpush1.bf16.msra.mxu0 0
  %120 = vmatprep.subr.bf16.mxu0 0
  %121 = vmatpush1.bf16.msra.mxu0 0
  %122 = vmatprep.subr.bf16.mxu0 0
  %123 = vmatpush1.bf16.msra.mxu0 0
  %124 = vmatprep.subr.bf16.mxu0 0
  %125 = vmatpush1.bf16.msra.mxu0 0
  %126 = vmatprep.subr.bf16.mxu0 0
  %127 = vmatpush1.bf16.msra.mxu0 0
  %128 = vmatprep.mubr.bf16.mxu0 0
  %129 = vmatmul.mubr.bf16.gmra.mrb[0].mxu0 %v24
  %v130 = vpop.f32.mrb[0].mxu0
  %v131 = vadd.f32 %v46, %v130
  %v132 = vpop.f32.mrb[0].mxu0
  %v133 = vpop.f32.mrb[0].mxu0
  %v134 = vpop.f32.mrb[0].mxu0
  %135 = vdwg.mxu0
  %v136 = vmax.f32 %v131, 0.0
  %v137 = vpack.c.bf16 %v136, %v136
  %v138 = vld [vmem:[%s3] sm:$0xf]
  %v139 = vld [vmem:[%s3 + $0x4] sm:$0xf]
  %v140 = vld [vmem:[%s3 + $0x8] sm:$0xf]
  %v141 = vld [vmem:[%s3 + $0xc] sm:$0xf]
  %v142 = vld [vmem:[%s3 + $0x10] sm:$0xf]
  %v143 = vld [vmem:[%s3 + $0x14] sm:$0xf]
  %v144 = vld [vmem:[%s3 + $0x18] sm:$0xf]
  %v145 = vld [vmem:[%s3 + $0x1c] sm:$0xf]
  %v146 = vld [vmem:[%s3 + $0x20] sm:$0xf]
  %v147 = vld [vmem:[%s3 + $0x24] sm:$0xf]
  %v148 = vld [vmem:[%s3 + $0x28] sm:$0xf]
  %v149 = vld [vmem:[%s3 + $0x2c] sm:$0xf]
  %v150 = vld [vmem:[%s3 + $0x30] sm:$0xf]
  %v151 = vld [vmem:[%s3 + $0x34] sm:$0xf]
  %v152 = vld [vmem:[%s3 + $0x38] sm:$0xf]
  %v153 = vld [vmem:[%s3 + $0x3c] sm:$0xf]
  %v154 = vld [vmem:[#allocation2] sm:$0x1]
  %v156 = vlaneseq
  %v157 = vshrl.u32 %v156, 7
  %v158 = vsub.s32 0, %v157
  %v159 = vrot.slane %v154, %v158
  %v177 = vunpack.c.l.b16 %v138
  %v178 = vunpack.c.l.b16 %v139
  %v179 = vunpack.c.l.b16 %v140
  %v180 = vunpack.c.l.b16 %v141
  %v181 = vunpack.c.l.b16 %v142
  %v182 = vunpack.c.l.b16 %v143
  %v183 = vunpack.c.l.b16 %v144
  %v184 = vunpack.c.l.b16 %v145
  %v185 = vunpack.c.l.b16 %v146
  %v186 = vunpack.c.l.b16 %v147
  %v187 = vunpack.c.l.b16 %v148
  %v188 = vunpack.c.l.b16 %v149
  %v189 = vunpack.c.l.b16 %v150
  %v190 = vunpack.c.l.b16 %v151
  %v191 = vunpack.c.l.b16 %v152
  %v192 = vunpack.c.l.b16 %v153
  %v193 = vpack.c.b16 %v178, %v177
  %v194 = vpack.c.b16 %v180, %v179
  %v195 = vpack.c.b16 %v182, %v181
  %v196 = vpack.c.b16 %v184, %v183
  %v197 = vpack.c.b16 %v186, %v185
  %v198 = vpack.c.b16 %v188, %v187
  %v199 = vpack.c.b16 %v190, %v189
  %v200 = vpack.c.b16 %v192, %v191
  %209 = vmatprep.subr.bf16.mxu0 0
  %210 = vmatpush1.bf16.msra.mxu0 %v193
  %211 = vmatprep.subr.bf16.mxu0 0
  %212 = vmatpush1.bf16.msra.mxu0 %v194
  %213 = vmatprep.subr.bf16.mxu0 0
  %214 = vmatpush1.bf16.msra.mxu0 %v195
  %215 = vmatprep.subr.bf16.mxu0 0
  %216 = vmatpush1.bf16.msra.mxu0 %v196
  %217 = vmatprep.subr.bf16.mxu0 0
  %218 = vmatpush1.bf16.msra.mxu0 %v197
  %219 = vmatprep.subr.bf16.mxu0 0
  %220 = vmatpush1.bf16.msra.mxu0 %v198
  %221 = vmatprep.subr.bf16.mxu0 0
  %222 = vmatpush1.bf16.msra.mxu0 %v199
  %223 = vmatprep.subr.bf16.mxu0 0
  %224 = vmatpush1.bf16.msra.mxu0 %v200
  %225 = vmatprep.subr.bf16.mxu0 0
  %226 = vmatpush1.bf16.msra.mxu0 0
  %227 = vmatprep.subr.bf16.mxu0 0
  %228 = vmatpush1.bf16.msra.mxu0 0
  %229 = vmatprep.subr.bf16.mxu0 0
  %230 = vmatpush1.bf16.msra.mxu0 0
  %231 = vmatprep.subr.bf16.mxu0 0
  %232 = vmatpush1.bf16.msra.mxu0 0
  %233 = vmatprep.subr.bf16.mxu0 0
  %234 = vmatpush1.bf16.msra.mxu0 0
  %235 = vmatprep.subr.bf16.mxu0 0
  %236 = vmatpush1.bf16.msra.mxu0 0
  %237 = vmatprep.subr.bf16.mxu0 0
  %238 = vmatpush1.bf16.msra.mxu0 0
  %239 = vmatprep.subr.bf16.mxu0 0
  %240 = vmatpush1.bf16.msra.mxu0 0
  %241 = vmatprep.mubr.bf16.mxu0 0
  %242 = vmatmul.mubr.bf16.gmra.mrb[0].mxu0 %v137
  %v243 = vpop.f32.mrb[0].mxu0
  %v244 = vadd.f32 %v159, %v243
  %v245 = vpop.f32.mrb[0].mxu0
  %v246 = vpop.f32.mrb[0].mxu0
  %v247 = vpop.f32.mrb[0].mxu0
  %248 = vdwg.mxu0
  %vm249 = vcmask 3072
  %250 = vst.msk [vmem:[%s5] sm:$0xf] %vm249, %v244
  // Predicated region
  $region22: #{_lambda_.3} parent=0 // pred_check
    _
  $region23: #{_lambda_.3} parent=0 // pred_check_branch
    %252 = sbr.rel (0) target = $region25
  $region24: #{_lambda_.3} parent=0 // pred_region
    _
  $region25: #{_lambda_.3} parent=0 // pred_fallthru
    _
  // Predicated region
  $region26: #{_lambda_.3} parent=0 // pred_check
    _
  $region27: #{_lambda_.3} parent=0 // pred_check_branch
    %254 = sbr.rel (0) target = $region29
  $region28: #{_lambda_.3} parent=0 // pred_region
    _
  $region29: #{_lambda_.3} parent=0 // pred_fallthru
    _

// kernel: _lambda_.2
$region0: #{_lambda_.2}
  #allocation0 [shape = 'u32[]', space=smem, size = 0x4, offset = 0x4, fixed_abs, tag = 'smem constant byte address 0x4 - core index']
  #allocation1 [shape = 'u32[144,128]{1,0:T(1,128)}', space=vmem, size = 0x12000, scoped, tag = 'internal scratch']
  %s0 = inlined_call_operand.vmem [shape: f32[4,16,16], index: 0, kind: input, shape index: {}]
  %s1 = inlined_call_operand.vmem [shape: f32[4,16,32], index: 1, kind: input, shape index: {}]
  %s2 = inlined_call_operand.vmem [shape: bf16[3,32,32], index: 2, kind: input, shape index: {}]
  %s3 = inlined_call_operand.vmem [shape: f32[1,1,32], index: 3, kind: input, shape index: {}]
  %s4 = inlined_call_operand.vmem [shape: bf16[3,32,64], index: 4, kind: input, shape index: {}]
  %s5 = inlined_call_operand.vmem [shape: f32[1,1,64], index: 5, kind: input, shape index: {}]
  %s6 = inlined_call_operand.vmem [shape: bf16[3,64,128], index: 6, kind: input, shape index: {}]
  %s7 = inlined_call_operand.vmem [shape: f32[1,1,128], index: 7, kind: input, shape index: {}]
  %s8 = inlined_call_operand.vmem [shape: f32[4,1,128], index: 8, kind: output, shape index: {}]
  %s9 = sld [smem:[#allocation0]]
  $region65: #{_lambda_.2} parent=0
    _
  %s11 = ssub.s32 1, %s9
  %s12 = scalar_select 0, %s11, %s9
  loop: start=0, step=1, limit=4
  $region2: #{_lambda_.2} parent=0 // loop_pre_header
    _
  $region3: #{_lambda_.2} parent=0 // loop_header
    %s14 = sphi 0, %s18
    %p15 = scmp.ge.s32.totalorder %s14, 4
    %s24 = sphi 0, %s26
    %s27 = sphi 0, %s24
    %s28 = sphi 0, %s27
    %s44 = sphi 0, %s28
    %s50 = sphi 0, %s52
    %s53 = sphi 0, %s50
    %s54 = sphi 0, %s53
    %s70 = sphi 0, %s54
    %s74 = sphi 0, %s74
    %s76 = sphi 0, %s74
    %s77 = sphi 0, %s76
    %s91 = sphi 0, %s77
    %s95 = sphi 0, %s95
    %s97 = sphi 0, %s95
    %s98 = sphi 0, %s97
    %s112 = sphi 0, %s98
    %s116 = sphi 0, %s116
    %s118 = sphi 0, %s116
    %s119 = sphi 0, %s118
    %s133 = sphi 0, %s119
    %s137 = sphi 0, %s137
    %s139 = sphi 0, %s137
    %s140 = sphi 0, %s139
    %s154 = sphi 0, %s140
    %s158 = sphi 0, %s158
    %s160 = sphi 0, %s158
    %s161 = sphi 0, %s160
    %s175 = sphi 0, %s161
    %s179 = sphi 0, %s179
    %s181 = sphi 0, %s179
    %s182 = sphi 0, %s181
    %s196 = sphi 0, %s182
    %s202 = sphi 0, %s204
    %s205 = sphi 0, %s202
    %s206 = sphi 0, %s205
    %s222 = sphi 0, %s206
  $region4: #{_lambda_.2} parent=0 // loop_header_branch
    %17 = sbr.rel (%p15) target = $region8
  $region5: #{_lambda_.2} parent=0 // loop_body
    %s19 = ssub.s32 %s14, 1
    %s20 = ssub.s32 %s14, 2
    %s21 = sadd.s32 %s14, 1
    %s22 = ssub.s32 %s14, %s21
    %p23 = scmp.eq.s32.totalorder %s22, 0
    %s25 = sadd.s32 %s24, 1
    %s26 = scalar_select %p23, %s24, %s25
    %p29 = pneg %p23
    %p30 = scmp.eq.s32.totalorder %s14, 1
    %p31 = por %p29, %p30
    %p32 = scmp.ne.s32.totalorder %s24, %s27
    %p33 = scmp.eq.s32.totalorder %s14, 0
    %p34 = por %p32, %p33
    %p35 = scmp.ne.s32.totalorder %s24, %s27
    %p36 = scmp.eq.s32.totalorder %s19, 1
    %p37 = por %p35, %p36
    %p38 = scmp.ne.s32.totalorder %s27, %s28
    %p39 = scmp.eq.s32.totalorder %s19, 0
    %p40 = por %p38, %p39
    %p41 = scmp.ne.s32.totalorder %s27, %s28
    %p42 = scmp.eq.s32.totalorder %s20, 1
    %p43 = por %p41, %p42
    %p45 = scmp.ne.s32.totalorder %s28, %s44
    %p46 = scmp.eq.s32.totalorder %s20, 0
    %p47 = por %p45, %p46
    %s48 = ssub.s32 %s14, %s21
    %p49 = scmp.eq.s32.totalorder %s48, 0
    %s51 = sadd.s32 %s50, 1
    %s52 = scalar_select %p49, %s50, %s51
    %p55 = pneg %p49
    %p56 = scmp.eq.s32.totalorder %s14, 1
    %p57 = por %p55, %p56
    %p58 = scmp.ne.s32.totalorder %s50, %s53
    %p59 = scmp.eq.s32.totalorder %s14, 0
    %p60 = por %p58, %p59
    %p61 = scmp.ne.s32.totalorder %s50, %s53
    %p62 = scmp.eq.s32.totalorder %s19, 1
    %p63 = por %p61, %p62
    %p64 = scmp.ne.s32.totalorder %s53, %s54
    %p65 = scmp.eq.s32.totalorder %s19, 0
    %p66 = por %p64, %p65
    %p67 = scmp.ne.s32.totalorder %s53, %s54
    %p68 = scmp.eq.s32.totalorder %s20, 1
    %p69 = por %p67, %p68
    %p71 = scmp.ne.s32.totalorder %s54, %s70
    %p72 = scmp.eq.s32.totalorder %s20, 0
    %p73 = por %p71, %p72
    %s75 = sadd.s32 %s74, 1
    %p78 = scmp.eq.s32.totalorder %s14, 1
    %p79 = scmp.ne.s32.totalorder %s74, %s76
    %p80 = scmp.eq.s32.totalorder %s14, 0
    %p81 = por %p79, %p80
    %p82 = scmp.ne.s32.totalorder %s74, %s76
    %p83 = scmp.eq.s32.totalorder %s19, 1
    %p84 = por %p82, %p83
    %p85 = scmp.ne.s32.totalorder %s76, %s77
    %p86 = scmp.eq.s32.totalorder %s19, 0
    %p87 = por %p85, %p86
    %p88 = scmp.ne.s32.totalorder %s76, %s77
    %p89 = scmp.eq.s32.totalorder %s20, 1
    %p90 = por %p88, %p89
    %p92 = scmp.ne.s32.totalorder %s77, %s91
    %p93 = scmp.eq.s32.totalorder %s20, 0
    %p94 = por %p92, %p93
    %s96 = sadd.s32 %s95, 1
    %p99 = scmp.eq.s32.totalorder %s14, 1
    %p100 = scmp.ne.s32.totalorder %s95, %s97
    %p101 = scmp.eq.s32.totalorder %s14, 0
    %p102 = por %p100, %p101
    %p103 = scmp.ne.s32.totalorder %s95, %s97
    %p104 = scmp.eq.s32.totalorder %s19, 1
    %p105 = por %p103, %p104
    %p106 = scmp.ne.s32.totalorder %s97, %s98
    %p107 = scmp.eq.s32.totalorder %s19, 0
    %p108 = por %p106, %p107
    %p109 = scmp.ne.s32.totalorder %s97, %s98
    %p110 = scmp.eq.s32.totalorder %s20, 1
    %p111 = por %p109, %p110
    %p113 = scmp.ne.s32.totalorder %s98, %s112
    %p114 = scmp.eq.s32.totalorder %s20, 0
    %p115 = por %p113, %p114
    %s117 = sadd.s32 %s116, 1
    %p120 = scmp.eq.s32.totalorder %s14, 1
    %p121 = scmp.ne.s32.totalorder %s116, %s118
    %p122 = scmp.eq.s32.totalorder %s14, 0
    %p123 = por %p121, %p122
    %p124 = scmp.ne.s32.totalorder %s116, %s118
    %p125 = scmp.eq.s32.totalorder %s19, 1
    %p126 = por %p124, %p125
    %p127 = scmp.ne.s32.totalorder %s118, %s119
    %p128 = scmp.eq.s32.totalorder %s19, 0
    %p129 = por %p127, %p128
    %p130 = scmp.ne.s32.totalorder %s118, %s119
    %p131 = scmp.eq.s32.totalorder %s20, 1
    %p132 = por %p130, %p131
    %p134 = scmp.ne.s32.totalorder %s119, %s133
    %p135 = scmp.eq.s32.totalorder %s20, 0
    %p136 = por %p134, %p135
    %s138 = sadd.s32 %s137, 1
    %p141 = scmp.eq.s32.totalorder %s14, 1
    %p142 = scmp.ne.s32.totalorder %s137, %s139
    %p143 = scmp.eq.s32.totalorder %s14, 0
    %p144 = por %p142, %p143
    %p145 = scmp.ne.s32.totalorder %s137, %s139
    %p146 = scmp.eq.s32.totalorder %s19, 1
    %p147 = por %p145, %p146
    %p148 = scmp.ne.s32.totalorder %s139, %s140
    %p149 = scmp.eq.s32.totalorder %s19, 0
    %p150 = por %p148, %p149
    %p151 = scmp.ne.s32.totalorder %s139, %s140
    %p152 = scmp.eq.s32.totalorder %s20, 1
    %p153 = por %p151, %p152
    %p155 = scmp.ne.s32.totalorder %s140, %s154
    %p156 = scmp.eq.s32.totalorder %s20, 0
    %p157 = por %p155, %p156
    %s159 = sadd.s32 %s158, 1
    %p162 = scmp.eq.s32.totalorder %s14, 1
    %p163 = scmp.ne.s32.totalorder %s158, %s160
    %p164 = scmp.eq.s32.totalorder %s14, 0
    %p165 = por %p163, %p164
    %p166 = scmp.ne.s32.totalorder %s158, %s160
    %p167 = scmp.eq.s32.totalorder %s19, 1
    %p168 = por %p166, %p167
    %p169 = scmp.ne.s32.totalorder %s160, %s161
    %p170 = scmp.eq.s32.totalorder %s19, 0
    %p171 = por %p169, %p170
    %p172 = scmp.ne.s32.totalorder %s160, %s161
    %p173 = scmp.eq.s32.totalorder %s20, 1
    %p174 = por %p172, %p173
    %p176 = scmp.ne.s32.totalorder %s161, %s175
    %p177 = scmp.eq.s32.totalorder %s20, 0
    %p178 = por %p176, %p177
    %s180 = sadd.s32 %s179, 1
    %p183 = scmp.eq.s32.totalorder %s14, 1
    %p184 = scmp.ne.s32.totalorder %s179, %s181
    %p185 = scmp.eq.s32.totalorder %s14, 0
    %p186 = por %p184, %p185
    %p187 = scmp.ne.s32.totalorder %s179, %s181
    %p188 = scmp.eq.s32.totalorder %s19, 1
    %p189 = por %p187, %p188
    %p190 = scmp.ne.s32.totalorder %s181, %s182
    %p191 = scmp.eq.s32.totalorder %s19, 0
    %p192 = por %p190, %p191
    %p193 = scmp.ne.s32.totalorder %s181, %s182
    %p194 = scmp.eq.s32.totalorder %s20, 1
    %p195 = por %p193, %p194
    %p197 = scmp.ne.s32.totalorder %s182, %s196
    %p198 = scmp.eq.s32.totalorder %s20, 0
    %p199 = por %p197, %p198
    %s200 = ssub.s32 %s14, %s21
    %p201 = scmp.eq.s32.totalorder %s200, 0
    %s203 = sadd.s32 %s202, 1
    %s204 = scalar_select %p201, %s202, %s203
    %p207 = pneg %p201
    %p208 = scmp.eq.s32.totalorder %s14, 1
    %p209 = por %p207, %p208
    %p210 = scmp.ne.s32.totalorder %s202, %s205
    %p211 = scmp.eq.s32.totalorder %s14, 0
    %p212 = por %p210, %p211
    %p213 = scmp.ne.s32.totalorder %s202, %s205
    %p214 = scmp.eq.s32.totalorder %s19, 1
    %p215 = por %p213, %p214
    %p216 = scmp.ne.s32.totalorder %s205, %s206
    %p217 = scmp.eq.s32.totalorder %s19, 0
    %p218 = por %p216, %p217
    %p219 = scmp.ne.s32.totalorder %s205, %s206
    %p220 = scmp.eq.s32.totalorder %s20, 1
    %p221 = por %p219, %p220
    %p223 = scmp.ne.s32.totalorder %s206, %s222
    %p224 = scmp.eq.s32.totalorder %s20, 0
    %p225 = por %p223, %p224
    %p226 = scmp.le.s32.totalorder 1, %s14
    %p227 = scmp.lt.s32.totalorder %s14, 3
    %p228 = pnand %p226, %p227
    %p229 = pneg %p228
    // Predicated region
    $region9: #{_lambda_.2} parent=5 // pred_check
      _
    $region10: #{_lambda_.2} parent=5 // pred_check_branch
      %231 = sbr.rel (%p228) target = $region12
    $region11: #{_lambda_.2} parent=5 // pred_region
      %s232 = ssub.s32 %s14, 1
      // Predicated region
      $region13: #{_lambda_.2} parent=11 // pred_check
        %p233 = pneg %p87
      $region14: #{_lambda_.2} parent=11 // pred_check_branch
        %235 = sbr.rel (%p233) target = $region16
      $region15: #{_lambda_.2} parent=11 // pred_region
        _
      $region16: #{_lambda_.2} parent=11 // pred_fallthru
        _
      // Predicated region
      $region17: #{_lambda_.2} parent=11 // pred_check
        %p236 = pneg %p108
      $region18: #{_lambda_.2} parent=11 // pred_check_branch
        %238 = sbr.rel (%p236) target = $region20
      $region19: #{_lambda_.2} parent=11 // pred_region
        _
      $region20: #{_lambda_.2} parent=11 // pred_fallthru
        _
      // Predicated region
      $region21: #{_lambda_.2} parent=11 // pred_check
        %p239 = pneg %p129
      $region22: #{_lambda_.2} parent=11 // pred_check_branch
        %241 = sbr.rel (%p239) target = $region24
      $region23: #{_lambda_.2} parent=11 // pred_region
        _
      $region24: #{_lambda_.2} parent=11 // pred_fallthru
        _
      // Predicated region
      $region25: #{_lambda_.2} parent=11 // pred_check
        %p242 = pneg %p150
      $region26: #{_lambda_.2} parent=11 // pred_check_branch
        %244 = sbr.rel (%p242) target = $region28
      $region27: #{_lambda_.2} parent=11 // pred_region
        _
      $region28: #{_lambda_.2} parent=11 // pred_fallthru
        _
      // Predicated region
      $region29: #{_lambda_.2} parent=11 // pred_check
        %p245 = pneg %p171
      $region30: #{_lambda_.2} parent=11 // pred_check_branch
        %247 = sbr.rel (%p245) target = $region32
      $region31: #{_lambda_.2} parent=11 // pred_region
        _
      $region32: #{_lambda_.2} parent=11 // pred_fallthru
        _
      // Predicated region
      $region33: #{_lambda_.2} parent=11 // pred_check
        %p248 = pneg %p192
      $region34: #{_lambda_.2} parent=11 // pred_check_branch
        %250 = sbr.rel (%p248) target = $region36
      $region35: #{_lambda_.2} parent=11 // pred_region
        _
      $region36: #{_lambda_.2} parent=11 // pred_fallthru
        _
    $region12: #{_lambda_.2} parent=5 // pred_fallthru
      _
    %p251 = scmp.lt.s32.totalorder %s14, 2
    // Predicated region
    $region37: #{_lambda_.2} parent=5 // pred_check
      %p252 = pneg %p251
    $region38: #{_lambda_.2} parent=5 // pred_check_branch
      %254 = sbr.rel (%p252) target = $region40
    $region39: #{_lambda_.2} parent=5 // pred_region
      // Predicated region
      $region41: #{_lambda_.2} parent=39 // pred_check
        %p255 = pneg %p34
      $region42: #{_lambda_.2} parent=39 // pred_check_branch
        %257 = sbr.rel (%p255) target = $region44
      $region43: #{_lambda_.2} parent=39 // pred_region
        %s258 = smul.u32 2, %s14
        %p259 = scmp.lt.s32.totalorder %s258, 3
        %s260 = scalar_select %p259, %s258, 3
        %s261 = smul.addr %s260, 2
        %s262 = smul.addr %s261, 8
        %s263 = scalar_lea.vmem %s0, %s262
        %s264 = smul.u32 2, %s14
      $region44: #{_lambda_.2} parent=39 // pred_fallthru
        _
      // Predicated region
      $region45: #{_lambda_.2} parent=39 // pred_check
        %p265 = pneg %p60
      $region46: #{_lambda_.2} parent=39 // pred_check_branch
        %267 = sbr.rel (%p265) target = $region48
      $region47: #{_lambda_.2} parent=39 // pred_region
        %s268 = smul.u32 2, %s14
        %p269 = scmp.lt.s32.totalorder %s268, 3
        %s270 = scalar_select %p269, %s268, 3
        %s271 = smul.addr %s270, 2
        %s272 = smul.addr %s271, 8
        %s273 = scalar_lea.vmem %s1, %s272
        %s274 = smul.u32 2, %s14
      $region48: #{_lambda_.2} parent=39 // pred_fallthru
        _
    $region40: #{_lambda_.2} parent=5 // pred_fallthru
      _
    %p275 = scmp.le.s32.totalorder 1, %s14
    %p276 = scmp.lt.s32.totalorder %s14, 3
    %p277 = pnand %p275, %p276
    %p278 = pneg %p277
    // Predicated region
    $region49: #{_lambda_.2} parent=5 // pred_check
      _
    $region50: #{_lambda_.2} parent=5 // pred_check_branch
      %280 = sbr.rel (%p277) target = $region52
    $region51: #{_lambda_.2} parent=5 // pred_region
      %s281 = ssub.s32 %s14, 1
      %s282 = smul.u32 2, %s19
      %p283 = scmp.lt.s32.totalorder %s282, 3
      %s284 = scalar_select %p283, %s282, 3
      %s285 = smul.addr %s284, 2
      %s286 = smul.addr %s285, 8
      %s287 = scalar_lea.vmem %s0, %s286
      %p288 = pneg %p40
      %p289 = pneg %p37
      %s290 = smul.u32 2, %s19
      %p291 = scmp.lt.s32.totalorder %s290, 3
      %s292 = scalar_select %p291, %s290, 3
      %s293 = smul.addr %s292, 2
      %s294 = smul.addr %s293, 8
      %s295 = scalar_lea.vmem %s1, %s294
      %p296 = pneg %p66
      %p297 = pneg %p63
      %p298 = pneg %p87
      %p299 = pneg %p84
      %p300 = pneg %p108
      %p301 = pneg %p105
      %p302 = pneg %p129
      %p303 = pneg %p126
      %p304 = pneg %p150
      %p305 = pneg %p147
      %p306 = pneg %p171
      %p307 = pneg %p168
      %p308 = pneg %p192
      %p309 = pneg %p189
      %p310 = pneg %p218
      %p311 = pneg %p215
      %s312 = smul.u32 2, %s19
      %p313 = scmp.lt.s32.totalorder %s312, 3
      %s314 = scalar_select %p313, %s312, 3
      %s315 = scalar_lea.vmem %s8, %s314
      %s316 = smul.u32 2, %s19
      %p317 = scmp.lt.s32.totalorder %s316, 3
      %s318 = scalar_select %p317, %s316, 3
      %s319 = smul.addr %s318, 2
      %s320 = smul.addr %s319, 8
      %s321 = scalar_lea.vmem %s0, %s320
      %s322 = smul.u32 2, %s19
      %s323 = smul.u32 2, %s19
      %p324 = scmp.lt.s32.totalorder %s323, 3
      %s325 = scalar_select %p324, %s323, 3
      %s326 = smul.addr %s325, 2
      %s327 = smul.addr %s326, 8
      %s328 = scalar_lea.vmem %s1, %s327
      %s329 = smul.u32 2, %s19
      %s330 = smul.u32 2, %s19
      %p331 = scmp.lt.s32.totalorder %s330, 3
      %s332 = scalar_select %p331, %s330, 3
      %s333 = scalar_lea.vmem %s8, %s332
      %s334 = smul.u32 2, %s19
      %v336 = vld [vmem:[%s321] sm:$0xff]
      %v337 = vld [vmem:[%s321 + $0x8] sm:$0xff]
      %v338 = vld [vmem:[%s321 + $0x10] sm:$0xff]
      %v339 = vld [vmem:[%s321 + $0x18] sm:$0xff]
      %v340 = vld [vmem:[%s328] sm:$0xff]
      %v341 = vld [vmem:[%s328 + $0x8] sm:$0xff]
      %v342 = vld [vmem:[%s328 + $0x10] sm:$0xff]
      %v343 = vld [vmem:[%s328 + $0x18] sm:$0xff]
      %v344 = vld [vmem:[%s2] sm:$0xf]
      %v345 = vld [vmem:[%s2 + $0x4] sm:$0xf]
      %v346 = vld [vmem:[%s2 + $0x8] sm:$0xf]
      %v347 = vld [vmem:[%s2 + $0xc] sm:$0xf]
      %v348 = vpack.c.bf16 %v341, %v340
      %v349 = vpack.c.bf16 %v343, %v342
      %v354 = vunpack.c.l.b16 %v344
      %v355 = vunpack.c.l.b16 %v345
      %v356 = vunpack.c.l.b16 %v346
      %v357 = vunpack.c.l.b16 %v347
      %v358 = vpack.c.b16 %v355, %v354
      %v359 = vpack.c.b16 %v357, %v356
      %vm362 = vcmask 261120
      %v364 = vsel %vm362, %v348, 0
      %v367 = vsel %vm362, %v349, 0
      %369 = vmatprep.subr.bf16.mxu0 0
      %370 = vmatpush1.bf16.msra.mxu0 %v358
      %371 = vmatprep.subr.bf16.mxu0 0
      %372 = vmatpush1.bf16.msra.mxu0 %v359
      %373 = vmatprep.subr.bf16.mxu0 0
      %374 = vmatpush1.bf16.msra.mxu0 0
      %375 = vmatprep.subr.bf16.mxu0 0
      %376 = vmatpush1.bf16.msra.mxu0 0
      %377 = vmatprep.subr.bf16.mxu0 0
      %378 = vmatpush1.bf16.msra.mxu0 0
      %379 = vmatprep.subr.bf16.mxu0 0
      %380 = vmatpush1.bf16.msra.mxu0 0
      %381 = vmatprep.subr.bf16.mxu0 0
      %382 = vmatpush1.bf16.msra.mxu0 0
      %383 = vmatprep.subr.bf16.mxu0 0
      %384 = vmatpush1.bf16.msra.mxu0 0
      %385 = vmatprep.subr.bf16.mxu0 0
      %386 = vmatpush1.bf16.msra.mxu0 0
      %387 = vmatprep.subr.bf16.mxu0 0
      %388 = vmatpush1.bf16.msra.mxu0 0
      %389 = vmatprep.subr.bf16.mxu0 0
      %390 = vmatpush1.bf16.msra.mxu0 0
      %391 = vmatprep.subr.bf16.mxu0 0
      %392 = vmatpush1.bf16.msra.mxu0 0
      %393 = vmatprep.subr.bf16.mxu0 0
      %394 = vmatpush1.bf16.msra.mxu0 0
      %395 = vmatprep.subr.bf16.mxu0 0
      %396 = vmatpush1.bf16.msra.mxu0 0
      %397 = vmatprep.subr.bf16.mxu0 0
      %398 = vmatpush1.bf16.msra.mxu0 0
      %399 = vmatprep.subr.bf16.mxu0 0
      %400 = vmatpush1.bf16.msra.mxu0 0
      %401 = vmatprep.mubr.bf16.mxu0 0
      %402 = vmatmul.mubr.bf16.gmra.mrb[0].mxu0 %v364
      %v403 = vpop.f32.mrb[0].mxu0
      %v404 = vadd.f32 0.0, %v403
      %v405 = vpop.f32.mrb[0].mxu0
      %v406 = vpop.f32.mrb[0].mxu0
      %v407 = vadd.f32 0.0, %v406
      %v408 = vpop.f32.mrb[0].mxu0
      %409 = vmatprep.mubr.bf16.mxu0 0
      %410 = vmatmul.mubr.bf16.gmra.mrb[0].mxu0 %v367
      %v411 = vpop.f32.mrb[0].mxu0
      %v412 = vadd.f32 0.0, %v411
      %v413 = vpop.f32.mrb[0].mxu0
      %v414 = vpop.f32.mrb[0].mxu0
      %v415 = vadd.f32 0.0, %v414
      %v416 = vpop.f32.mrb[0].mxu0
      %417 = vdwg.mxu0
      %vm418 = vcmask 130048
      %v420 = vsel %vm418, %v336, 0
      %v423 = vsel %vm418, %v337, 0
      %425 = vmatprep.subr.mxu0 0.0
      %426 = vmatpush1.msra.mxu0 %v340
      %427 = vmatprep.subr.mxu0 0.0
      %428 = vmatpush1.msra.mxu0 %v341
      %429 = vmatprep.subr.mxu0 0.0
      %430 = vmatpush1.msra.mxu0 0.0
      %431 = vmatprep.subr.mxu0 0.0
      %432 = vmatpush1.msra.mxu0 0.0
      %433 = vmatprep.subr.mxu0 0.0
      %434 = vmatpush1.msra.mxu0 0.0
      %435 = vmatprep.subr.mxu0 0.0
      %436 = vmatpush1.msra.mxu0 0.0
      %437 = vmatprep.subr.mxu0 0.0
      %438 = vmatpush1.msra.mxu0 0.0
      %439 = vmatprep.subr.mxu0 0.0
      %440 = vmatpush1.msra.mxu0 0.0
      %441 = vmatprep.subr.mxu0 0.0
      %442 = vmatpush1.msra.mxu0 0.0
      %443 = vmatprep.subr.mxu0 0.0
      %444 = vmatpush1.msra.mxu0 0.0
      %445 = vmatprep.subr.mxu0 0.0
      %446 = vmatpush1.msra.mxu0 0.0
      %447 = vmatprep.subr.mxu0 0.0
      %448 = vmatpush1.msra.mxu0 0.0
      %449 = vmatprep.subr.mxu0 0.0
      %450 = vmatpush1.msra.mxu0 0.0
      %451 = vmatprep.subr.mxu0 0.0
      %452 = vmatpush1.msra.mxu0 0.0
      %453 = vmatprep.subr.mxu0 0.0
      %454 = vmatpush1.msra.mxu0 0.0
      %455 = vmatprep.subr.mxu0 0.0
      %456 = vmatpush1.msra.mxu0 0.0
      %457 = vmatprep.subr.mxu0 0.0
      %458 = vmatpush1.msra.mxu0 0.0
      %459 = vmatprep.subr.mxu0 0.0
      %460 = vmatpush1.msra.mxu0 0.0
      %461 = vmatprep.subr.mxu0 0.0
      %462 = vmatpush1.msra.mxu0 0.0
      %463 = vmatprep.subr.mxu0 0.0
      %464 = vmatpush1.msra.mxu0 0.0
      %465 = vmatprep.subr.mxu0 0.0
      %466 = vmatpush1.msra.mxu0 0.0
      %467 = vmatprep.subr.mxu0 0.0
      %468 = vmatpush1.msra.mxu0 0.0
      %469 = vmatprep.subr.mxu0 0.0
      %470 = vmatpush1.msra.mxu0 0.0
      %471 = vmatprep.subr.mxu0 0.0
      %472 = vmatpush1.msra.mxu0 0.0
      %473 = vmatprep.subr.mxu0 0.0
      %474 = vmatpush1.msra.mxu0 0.0
      %475 = vmatprep.subr.mxu0 0.0
      %476 = vmatpush1.msra.mxu0 0.0
      %477 = vmatprep.subr.mxu0 0.0
      %478 = vmatpush1.msra.mxu0 0.0
      %479 = vmatprep.subr.mxu0 0.0
      %480 = vmatpush1.msra.mxu0 0.0
      %481 = vmatprep.subr.mxu0 0.0
      %482 = vmatpush1.msra.mxu0 0.0
      %483 = vmatprep.subr.mxu0 0.0
      %484 = vmatpush1.msra.mxu0 0.0
      %485 = vmatprep.subr.mxu0 0.0
      %486 = vmatpush1.msra.mxu0 0.0
      %487 = vmatprep.subr.mxu0 0.0
      %488 = vmatpush1.msra.mxu0 0.0
      %489 = vmatprep.mubr.f32.mxu0 0.0
      %490 = vmatmul.mubr.f32.gmra.mrb[0].mxu0 %v420
      %v491 = vpop.f32.mrb[0].mxu0
      %v492 = vadd.f32 0.0, %v491
      %v493 = vpop.f32.mrb[0].mxu0
      %494 = vmatprep.mubr.f32.mxu0 0.0
      %495 = vmatmul.mubr.f32.gmra.mrb[0].mxu0 %v423
      %v496 = vpop.f32.mrb[0].mxu0
      %v497 = vadd.f32 0.0, %v496
      %v498 = vpop.f32.mrb[0].mxu0
      %499 = vdwg.mxu0
      %v501 = vsel %vm418, %v338, 0
      %v504 = vsel %vm418, %v339, 0
      %506 = vmatprep.subr.mxu0 0.0
      %507 = vmatpush1.msra.mxu0 %v342
      %508 = vmatprep.subr.mxu0 0.0
      %509 = vmatpush1.msra.mxu0 %v343
      %510 = vmatprep.subr.mxu0 0.0
      %511 = vmatpush1.msra.mxu0 0.0
      %512 = vmatprep.subr.mxu0 0.0
      %513 = vmatpush1.msra.mxu0 0.0
      %514 = vmatprep.subr.mxu0 0.0
      %515 = vmatpush1.msra.mxu0 0.0
      %516 = vmatprep.subr.mxu0 0.0
      %517 = vmatpush1.msra.mxu0 0.0
      %518 = vmatprep.subr.mxu0 0.0
      %519 = vmatpush1.msra.mxu0 0.0
      %520 = vmatprep.subr.mxu0 0.0
      %521 = vmatpush1.msra.mxu0 0.0
      %522 = vmatprep.subr.mxu0 0.0
      %523 = vmatpush1.msra.mxu0 0.0
      %524 = vmatprep.subr.mxu0 0.0
      %525 = vmatpush1.msra.mxu0 0.0
      %526 = vmatprep.subr.mxu0 0.0
      %527 = vmatpush1.msra.mxu0 0.0
      %528 = vmatprep.subr.mxu0 0.0
      %529 = vmatpush1.msra.mxu0 0.0
      %530 = vmatprep.subr.mxu0 0.0
      %531 = vmatpush1.msra.mxu0 0.0
      %532 = vmatprep.subr.mxu0 0.0
      %533 = vmatpush1.msra.mxu0 0.0
      %534 = vmatprep.subr.mxu0 0.0
      %535 = vmatpush1.msra.mxu0 0.0
      %536 = vmatprep.subr.mxu0 0.0
      %537 = vmatpush1.msra.mxu0 0.0
      %538 = vmatprep.subr.mxu0 0.0
      %539 = vmatpush1.msra.mxu0 0.0
      %540 = vmatprep.subr.mxu0 0.0
      %541 = vmatpush1.msra.mxu0 0.0
      %542 = vmatprep.subr.mxu0 0.0
      %543 = vmatpush1.msra.mxu0 0.0
      %544 = vmatprep.subr.mxu0 0.0
      %545 = vmatpush1.msra.mxu0 0.0
      %546 = vmatprep.subr.mxu0 0.0
      %547 = vmatpush1.msra.mxu0 0.0
      %548 = vmatprep.subr.mxu0 0.0
      %549 = vmatpush1.msra.mxu0 0.0
      %550 = vmatprep.subr.mxu0 0.0
      %551 = vmatpush1.msra.mxu0 0.0
      %552 = vmatprep.subr.mxu0 0.0
      %553 = vmatpush1.msra.mxu0 0.0
      %554 = vmatprep.subr.mxu0 0.0
      %555 = vmatpush1.msra.mxu0 0.0
      %556 = vmatprep.subr.mxu0 0.0
      %557 = vmatpush1.msra.mxu0 0.0
      %558 = vmatprep.subr.mxu0 0.0
      %559 = vmatpush1.msra.mxu0 0.0
      %560 = vmatprep.subr.mxu0 0.0
      %561 = vmatpush1.msra.mxu0 0.0
      %562 = vmatprep.subr.mxu0 0.0
      %563 = vmatpush1.msra.mxu0 0.0
      %564 = vmatprep.subr.mxu0 0.0
      %565 = vmatpush1.msra.mxu0 0.0
      %566 = vmatprep.subr.mxu0 0.0
      %567 = vmatpush1.msra.mxu0 0.0
      %568 = vmatprep.subr.mxu0 0.0
      %569 = vmatpush1.msra.mxu0 0.0
      %570 = vmatprep.mubr.f32.mxu0 0.0
      %571 = vmatmul.mubr.f32.gmra.mrb[0].mxu0 %v501
      %v572 = vpop.f32.mrb[0].mxu0
      %v573 = vadd.f32 0.0, %v572
      %v574 = vpop.f32.mrb[0].mxu0
      %575 = vmatprep.mubr.f32.mxu0 0.0
      %576 = vmatmul.mubr.f32.gmra.mrb[0].mxu0 %v504
      %v577 = vpop.f32.mrb[0].mxu0
      %v578 = vadd.f32 0.0, %v577
      %v579 = vpop.f32.mrb[0].mxu0
      %580 = vdwg.mxu0
      %s581 = scalar_lea.vmem %s2, 16
      %v582 = vld [vmem:[%s581] sm:$0xf]
      %v583 = vld [vmem:[%s581 + $0x4] sm:$0xf]
      %v584 = vld [vmem:[%s581 + $0x8] sm:$0xf]
      %v585 = vld [vmem:[%s581 + $0xc] sm:$0xf]
      %v586 = vpack.c.bf16 %v497, %v492
      %v587 = vpack.c.bf16 %v578, %v573
      %v592 = vunpack.c.l.b16 %v582
      %v593 = vunpack.c.l.b16 %v583
      %v594 = vunpack.c.l.b16 %v584
      %v595 = vunpack.c.l.b16 %v585
      %v596 = vpack.c.b16 %v593, %v592
      %v597 = vpack.c.b16 %v595, %v594
      %v601 = vsel %vm362, %v586, 0
      %v604 = vsel %vm362, %v587, 0
      %606 = vmatprep.subr.bf16.mxu0 0
      %607 = vmatpush1.bf16.msra.mxu0 %v596
      %608 = vmatprep.subr.bf16.mxu0 0
      %609 = vmatpush1.bf16.msra.mxu0 %v597
      %610 = vmatprep.subr.bf16.mxu0 0
      %611 = vmatpush1.bf16.msra.mxu0 0
      %612 = vmatprep.subr.bf16.mxu0 0
      %613 = vmatpush1.bf16.msra.mxu0 0
      %614 = vmatprep.subr.bf16.mxu0 0
      %615 = vmatpush1.bf16.msra.mxu0 0
      %616 = vmatprep.subr.bf16.mxu0 0
      %617 = vmatpush1.bf16.msra.mxu0 0
      %618 = vmatprep.subr.bf16.mxu0 0
      %619 = vmatpush1.bf16.msra.mxu0 0
      %620 = vmatprep.subr.bf16.mxu0 0
      %621 = vmatpush1.bf16.msra.mxu0 0
      %622 = vmatprep.subr.bf16.mxu0 0
      %623 = vmatpush1.bf16.msra.mxu0 0
      %624 = vmatprep.subr.bf16.mxu0 0
      %625 = vmatpush1.bf16.msra.mxu0 0
      %626 = vmatprep.subr.bf16.mxu0 0
      %627 = vmatpush1.bf16.msra.mxu0 0
      %628 = vmatprep.subr.bf16.mxu0 0
      %629 = vmatpush1.bf16.msra.mxu0 0
      %630 = vmatprep.subr.bf16.mxu0 0
      %631 = vmatpush1.bf16.msra.mxu0 0
      %632 = vmatprep.subr.bf16.mxu0 0
      %633 = vmatpush1.bf16.msra.mxu0 0
      %634 = vmatprep.subr.bf16.mxu0 0
      %635 = vmatpush1.bf16.msra.mxu0 0
      %636 = vmatprep.subr.bf16.mxu0 0
      %637 = vmatpush1.bf16.msra.mxu0 0
      %638 = vmatprep.mubr.bf16.mxu0 0
      %639 = vmatmul.mubr.bf16.gmra.mrb[0].mxu0 %v601
      %v640 = vpop.f32.mrb[0].mxu0
      %v641 = vadd.f32 0.0, %v640
      %v642 = vpop.f32.mrb[0].mxu0
      %v643 = vpop.f32.mrb[0].mxu0
      %v644 = vadd.f32 0.0, %v643
      %v645 = vpop.f32.mrb[0].mxu0
      %646 = vmatprep.mubr.bf16.mxu0 0
      %647 = vmatmul.mubr.bf16.gmra.mrb[0].mxu0 %v604
      %v648 = vpop.f32.mrb[0].mxu0
      %v649 = vadd.f32 0.0, %v648
      %v650 = vpop.f32.mrb[0].mxu0
      %v651 = vpop.f32.mrb[0].mxu0
      %v652 = vadd.f32 0.0, %v651
      %v653 = vpop.f32.mrb[0].mxu0
      %654 = vdwg.mxu0
      %v655 = vadd.f32 %v404, %v641
      %v656 = vadd.f32 %v407, %v644
      %v657 = vadd.f32 %v412, %v649
      %v658 = vadd.f32 %v415, %v652
      %659 = vmatprep.subr.mxu0 0.0
      %660 = vmatpush1.msra.mxu0 %v492
      %661 = vmatprep.subr.mxu0 0.0
      %662 = vmatpush1.msra.mxu0 %v497
      %663 = vmatprep.subr.mxu0 0.0
      %664 = vmatpush1.msra.mxu0 0.0
      %665 = vmatprep.subr.mxu0 0.0
      %666 = vmatpush1.msra.mxu0 0.0
      %667 = vmatprep.subr.mxu0 0.0
      %668 = vmatpush1.msra.mxu0 0.0
      %669 = vmatprep.subr.mxu0 0.0
      %670 = vmatpush1.msra.mxu0 0.0
      %671 = vmatprep.subr.mxu0 0.0
      %672 = vmatpush1.msra.mxu0 0.0
      %673 = vmatprep.subr.mxu0 0.0
      %674 = vmatpush1.msra.mxu0 0.0
      %675 = vmatprep.subr.mxu0 0.0
      %676 = vmatpush1.msra.mxu0 0.0
      %677 = vmatprep.subr.mxu0 0.0
      %678 = vmatpush1.msra.mxu0 0.0
      %679 = vmatprep.subr.mxu0 0.0
      %680 = vmatpush1.msra.mxu0 0.0
      %681 = vmatprep.subr.mxu0 0.0
      %682 = vmatpush1.msra.mxu0 0.0
      %683 = vmatprep.subr.mxu0 0.0
      %684 = vmatpush1.msra.mxu0 0.0
      %685 = vmatprep.subr.mxu0 0.0
      %686 = vmatpush1.msra.mxu0 0.0
      %687 = vmatprep.subr.mxu0 0.0
      %688 = vmatpush1.msra.mxu0 0.0
      %689 = vmatprep.subr.mxu0 0.0
      %690 = vmatpush1.msra.mxu0 0.0
      %691 = vmatprep.subr.mxu0 0.0
      %692 = vmatpush1.msra.mxu0 0.0
      %693 = vmatprep.subr.mxu0 0.0
      %694 = vmatpush1.msra.mxu0 0.0
      %695 = vmatprep.subr.mxu0 0.0
      %696 = vmatpush1.msra.mxu0 0.0
      %697 = vmatprep.subr.mxu0 0.0
      %698 = vmatpush1.msra.mxu0 0.0
      %699 = vmatprep.subr.mxu0 0.0
      %700 = vmatpush1.msra.mxu0 0.0
      %701 = vmatprep.subr.mxu0 0.0
      %702 = vmatpush1.msra.mxu0 0.0
      %703 = vmatprep.subr.mxu0 0.0
      %704 = vmatpush1.msra.mxu0 0.0
      %705 = vmatprep.subr.mxu0 0.0
      %706 = vmatpush1.msra.mxu0 0.0
      %707 = vmatprep.subr.mxu0 0.0
      %708 = vmatpush1.msra.mxu0 0.0
      %709 = vmatprep.subr.mxu0 0.0
      %710 = vmatpush1.msra.mxu0 0.0
      %711 = vmatprep.subr.mxu0 0.0
      %712 = vmatpush1.msra.mxu0 0.0
      %713 = vmatprep.subr.mxu0 0.0
      %714 = vmatpush1.msra.mxu0 0.0
      %715 = vmatprep.subr.mxu0 0.0
      %716 = vmatpush1.msra.mxu0 0.0
      %717 = vmatprep.subr.mxu0 0.0
      %718 = vmatpush1.msra.mxu0 0.0
      %719 = vmatprep.subr.mxu0 0.0
      %720 = vmatpush1.msra.mxu0 0.0
      %721 = vmatprep.subr.mxu0 0.0
      %722 = vmatpush1.msra.mxu0 0.0
      %723 = vmatprep.mubr.f32.mxu0 0.0
      %724 = vmatmul.mubr.f32.gmra.mrb[0].mxu0 %v420
      %v725 = vpop.f32.mrb[0].mxu0
      %v726 = vadd.f32 0.0, %v725
      %v727 = vpop.f32.mrb[0].mxu0
      %728 = vmatprep.mubr.f32.mxu0 0.0
      %729 = vmatmul.mubr.f32.gmra.mrb[0].mxu0 %v423
      %v730 = vpop.f32.mrb[0].mxu0
      %v731 = vadd.f32 0.0, %v730
      %v732 = vpop.f32.mrb[0].mxu0
      %733 = vdwg.mxu0
      %734 = vmatprep.subr.mxu0 0.0
      %735 = vmatpush1.msra.mxu0 %v573
      %736 = vmatprep.subr.mxu0 0.0
      %737 = vmatpush1.msra.mxu0 %v578
      %738 = vmatprep.subr.mxu0 0.0
      %739 = vmatpush1.msra.mxu0 0.0
      %740 = vmatprep.subr.mxu0 0.0
      %741 = vmatpush1.msra.mxu0 0.0
      %742 = vmatprep.subr.mxu0 0.0
      %743 = vmatpush1.msra.mxu0 0.0
      %744 = vmatprep.subr.mxu0 0.0
      %745 = vmatpush1.msra.mxu0 0.0
      %746 = vmatprep.subr.mxu0 0.0
      %747 = vmatpush1.msra.mxu0 0.0
      %748 = vmatprep.subr.mxu0 0.0
      %749 = vmatpush1.msra.mxu0 0.0
      %750 = vmatprep.subr.mxu0 0.0
      %751 = vmatpush1.msra.mxu0 0.0
      %752 = vmatprep.subr.mxu0 0.0
      %753 = vmatpush1.msra.mxu0 0.0
      %754 = vmatprep.subr.mxu0 0.0
      %755 = vmatpush1.msra.mxu0 0.0
      %756 = vmatprep.subr.mxu0 0.0
      %757 = vmatpush1.msra.mxu0 0.0
      %758 = vmatprep.subr.mxu0 0.0
      %759 = vmatpush1.msra.mxu0 0.0
      %760 = vmatprep.subr.mxu0 0.0
      %761 = vmatpush1.msra.mxu0 0.0
      %762 = vmatprep.subr.mxu0 0.0
      %763 = vmatpush1.msra.mxu0 0.0
      %764 = vmatprep.subr.mxu0 0.0
      %765 = vmatpush1.msra.mxu0 0.0
      %766 = vmatprep.subr.mxu0 0.0
      %767 = vmatpush1.msra.mxu0 0.0
      %768 = vmatprep.subr.mxu0 0.0
      %769 = vmatpush1.msra.mxu0 0.0
      %770 = vmatprep.subr.mxu0 0.0
      %771 = vmatpush1.msra.mxu0 0.0
      %772 = vmatprep.subr.mxu0 0.0
      %773 = vmatpush1.msra.mxu0 0.0
      %774 = vmatprep.subr.mxu0 0.0
      %775 = vmatpush1.msra.mxu0 0.0
      %776 = vmatprep.subr.mxu0 0.0
      %777 = vmatpush1.msra.mxu0 0.0
      %778 = vmatprep.subr.mxu0 0.0
      %779 = vmatpush1.msra.mxu0 0.0
      %780 = vmatprep.subr.mxu0 0.0
      %781 = vmatpush1.msra.mxu0 0.0
      %782 = vmatprep.subr.mxu0 0.0
      %783 = vmatpush1.msra.mxu0 0.0
      %784 = vmatprep.subr.mxu0 0.0
      %785 = vmatpush1.msra.mxu0 0.0
      %786 = vmatprep.subr.mxu0 0.0
      %787 = vmatpush1.msra.mxu0 0.0
      %788 = vmatprep.subr.mxu0 0.0
      %789 = vmatpush1.msra.mxu0 0.0
      %790 = vmatprep.subr.mxu0 0.0
      %791 = vmatpush1.msra.mxu0 0.0
      %792 = vmatprep.subr.mxu0 0.0
      %793 = vmatpush1.msra.mxu0 0.0
      %794 = vmatprep.subr.mxu0 0.0
      %795 = vmatpush1.msra.mxu0 0.0
      %796 = vmatprep.subr.mxu0 0.0
      %797 = vmatpush1.msra.mxu0 0.0
      %798 = vmatprep.mubr.f32.mxu0 0.0
      %799 = vmatmul.mubr.f32.gmra.mrb[0].mxu0 %v501
      %v800 = vpop.f32.mrb[0].mxu0
      %v801 = vadd.f32 0.0, %v800
      %v802 = vpop.f32.mrb[0].mxu0
      %803 = vmatprep.mubr.f32.mxu0 0.0
      %804 = vmatmul.mubr.f32.gmra.mrb[0].mxu0 %v504
      %v805 = vpop.f32.mrb[0].mxu0
      %v806 = vadd.f32 0.0, %v805
      %v807 = vpop.f32.mrb[0].mxu0
      %808 = vdwg.mxu0
      %v809 = vmul.f32 %v726, 2.0
      %v810 = vmul.f32 %v731, 2.0
      %v811 = vmul.f32 %v801, 2.0
      %v812 = vmul.f32 %v806, 2.0
      %v813 = vsub.f32 %v809, %v340
      %v814 = vsub.f32 %v810, %v341
      %v815 = vsub.f32 %v811, %v342
      %v816 = vsub.f32 %v812, %v343
      %s817 = scalar_lea.vmem %s2, 32
      %v818 = vld [vmem:[%s817] sm:$0xf]
      %v819 = vld [vmem:[%s817 + $0x4] sm:$0xf]
      %v820 = vld [vmem:[%s817 + $0x8] sm:$0xf]
      %v821 = vld [vmem:[%s817 + $0xc] sm:$0xf]
      %v822 = vpack.c.bf16 %v814, %v813
      %v823 = vpack.c.bf16 %v816, %v815
      %v828 = vunpack.c.l.b16 %v818
      %v829 = vunpack.c.l.b16 %v819
      %v830 = vunpack.c.l.b16 %v820
      %v831 = vunpack.c.l.b16 %v821
      %v832 = vpack.c.b16 %v829, %v828
      %v833 = vpack.c.b16 %v831, %v830
      %v837 = vsel %vm362, %v822, 0
      %v840 = vsel %vm362, %v823, 0
      %842 = vmatprep.subr.bf16.mxu0 0
      %843 = vmatpush1.bf16.msra.mxu0 %v832
      %844 = vmatprep.subr.bf16.mxu0 0
      %845 = vmatpush1.bf16.msra.mxu0 %v833
      %846 = vmatprep.subr.bf16.mxu0 0
      %847 = vmatpush1.bf16.msra.mxu0 0
      %848 = vmatprep.subr.bf16.mxu0 0
      %849 = vmatpush1.bf16.msra.mxu0 0
      %850 = vmatprep.subr.bf16.mxu0 0
      %851 = vmatpush1.bf16.msra.mxu0 0
      %852 = vmatprep.subr.bf16.mxu0 0
      %853 = vmatpush1.bf16.msra.mxu0 0
      %854 = vmatprep.subr.bf16.mxu0 0
      %855 = vmatpush1.bf16.msra.mxu0 0
      %856 = vmatprep.subr.bf16.mxu0 0
      %857 = vmatpush1.bf16.msra.mxu0 0
      %858 = vmatprep.subr.bf16.mxu0 0
      %859 = vmatpush1.bf16.msra.mxu0 0
      %860 = vmatprep.subr.bf16.mxu0 0
      %861 = vmatpush1.bf16.msra.mxu0 0
      %862 = vmatprep.subr.bf16.mxu0 0
      %863 = vmatpush1.bf16.msra.mxu0 0
      %864 = vmatprep.subr.bf16.mxu0 0
      %865 = vmatpush1.bf16.msra.mxu0 0
      %866 = vmatprep.subr.bf16.mxu0 0
      %867 = vmatpush1.bf16.msra.mxu0 0
      %868 = vmatprep.subr.bf16.mxu0 0
      %869 = vmatpush1.bf16.msra.mxu0 0
      %870 = vmatprep.subr.bf16.mxu0 0
      %871 = vmatpush1.bf16.msra.mxu0 0
      %872 = vmatprep.subr.bf16.mxu0 0
      %873 = vmatpush1.bf16.msra.mxu0 0
      %874 = vmatprep.mubr.bf16.mxu0 0
      %875 = vmatmul.mubr.bf16.gmra.mrb[0].mxu0 %v837
      %v876 = vpop.f32.mrb[0].mxu0
      %v877 = vadd.f32 0.0, %v876
      %v878 = vpop.f32.mrb[0].mxu0
      %v879 = vpop.f32.mrb[0].mxu0
      %v880 = vadd.f32 0.0, %v879
      %v881 = vpop.f32.mrb[0].mxu0
      %882 = vmatprep.mubr.bf16.mxu0 0
      %883 = vmatmul.mubr.bf16.gmra.mrb[0].mxu0 %v840
      %v884 = vpop.f32.mrb[0].mxu0
      %v885 = vadd.f32 0.0, %v884
      %v886 = vpop.f32.mrb[0].mxu0
      %v887 = vpop.f32.mrb[0].mxu0
      %v888 = vadd.f32 0.0, %v887
      %v889 = vpop.f32.mrb[0].mxu0
      %890 = vdwg.mxu0
      %v891 = vadd.f32 %v655, %v877
      %v892 = vadd.f32 %v656, %v880
      %v893 = vadd.f32 %v657, %v885
      %v894 = vadd.f32 %v658, %v888
      %v895 = vld [vmem:[%s3] sm:$0x1]
      %v897 = vlaneseq
      %v898 = vshrl.u32 %v897, 7
      %v899 = vsub.s32 0, %v898
      %v900 = vrot.slane %v895, %v899
      %v902 = vadd.f32 %v891, %v900
      %v903 = vadd.f32 %v892, %v900
      %v904 = vadd.f32 %v893, %v900
      %v905 = vadd.f32 %v894, %v900
      %v906 = vld [vmem:[%s4] sm:$0xf]
      %v907 = vld [vmem:[%s4 + $0x4] sm:$0xf]
      %v908 = vld [vmem:[%s4 + $0x8] sm:$0xf]
      %v909 = vld [vmem:[%s4 + $0xc] sm:$0xf]
      %v910 = vpack.c.bf16 %v903, %v902
      %v911 = vpack.c.bf16 %v905, %v904
      %v916 = vunpack.c.l.b16 %v906
      %v917 = vunpack.c.l.b16 %v907
      %v918 = vunpack.c.l.b16 %v908
      %v919 = vunpack.c.l.b16 %v909
      %v920 = vpack.c.b16 %v917, %v916
      %v921 = vpack.c.b16 %v919, %v918
      %v925 = vsel %vm362, %v910, 0
      %v928 = vsel %vm362, %v911, 0
      %930 = vmatprep.subr.bf16.mxu0 0
      %931 = vmatpush1.bf16.msra.mxu0 %v920
      %932 = vmatprep.subr.bf16.mxu0 0
      %933 = vmatpush1.bf16.msra.mxu0 %v921
      %934 = vmatprep.subr.bf16.mxu0 0
      %935 = vmatpush1.bf16.msra.mxu0 0
      %936 = vmatprep.subr.bf16.mxu0 0
      %937 = vmatpush1.bf16.msra.mxu0 0
      %938 = vmatprep.subr.bf16.mxu0 0
      %939 = vmatpush1.bf16.msra.mxu0 0
      %940 = vmatprep.subr.bf16.mxu0 0
      %941 = vmatpush1.bf16.msra.mxu0 0
      %942 = vmatprep.subr.bf16.mxu0 0
      %943 = vmatpush1.bf16.msra.mxu0 0
      %944 = vmatprep.subr.bf16.mxu0 0
      %945 = vmatpush1.bf16.msra.mxu0 0
      %946 = vmatprep.subr.bf16.mxu0 0
      %947 = vmatpush1.bf16.msra.mxu0 0
      %948 = vmatprep.subr.bf16.mxu0 0
      %949 = vmatpush1.bf16.msra.mxu0 0
      %950 = vmatprep.subr.bf16.mxu0 0
      %951 = vmatpush1.bf16.msra.mxu0 0
      %952 = vmatprep.subr.bf16.mxu0 0
      %953 = vmatpush1.bf16.msra.mxu0 0
      %954 = vmatprep.subr.bf16.mxu0 0
      %955 = vmatpush1.bf16.msra.mxu0 0
      %956 = vmatprep.subr.bf16.mxu0 0
      %957 = vmatpush1.bf16.msra.mxu0 0
      %958 = vmatprep.subr.bf16.mxu0 0
      %959 = vmatpush1.bf16.msra.mxu0 0
      %960 = vmatprep.subr.bf16.mxu0 0
      %961 = vmatpush1.bf16.msra.mxu0 0
      %962 = vmatprep.mubr.bf16.mxu0 0
      %963 = vmatmul.mubr.bf16.gmra.mrb[0].mxu0 %v925
      %v964 = vpop.f32.mrb[0].mxu0
      %v965 = vadd.f32 0.0, %v964
      %v966 = vpop.f32.mrb[0].mxu0
      %v967 = vpop.f32.mrb[0].mxu0
      %v968 = vadd.f32 0.0, %v967
      %v969 = vpop.f32.mrb[0].mxu0
      %970 = vmatprep.mubr.bf16.mxu0 0
      %971 = vmatmul.mubr.bf16.gmra.mrb[0].mxu0 %v928
      %v972 = vpop.f32.mrb[0].mxu0
      %v973 = vadd.f32 0.0, %v972
      %v974 = vpop.f32.mrb[0].mxu0
      %v975 = vpop.f32.mrb[0].mxu0
      %v976 = vadd.f32 0.0, %v975
      %v977 = vpop.f32.mrb[0].mxu0
      %978 = vdwg.mxu0
      %979 = vmatprep.subr.mxu0 0.0
      %980 = vmatpush1.msra.mxu0 %v902
      %981 = vmatprep.subr.mxu0 0.0
      %982 = vmatpush1.msra.mxu0 %v903
      %983 = vmatprep.subr.mxu0 0.0
      %984 = vmatpush1.msra.mxu0 0.0
      %985 = vmatprep.subr.mxu0 0.0
      %986 = vmatpush1.msra.mxu0 0.0
      %987 = vmatprep.subr.mxu0 0.0
      %988 = vmatpush1.msra.mxu0 0.0
      %989 = vmatprep.subr.mxu0 0.0
      %990 = vmatpush1.msra.mxu0 0.0
      %991 = vmatprep.subr.mxu0 0.0
      %992 = vmatpush1.msra.mxu0 0.0
      %993 = vmatprep.subr.mxu0 0.0
      %994 = vmatpush1.msra.mxu0 0.0
      %995 = vmatprep.subr.mxu0 0.0
      %996 = vmatpush1.msra.mxu0 0.0
      %997 = vmatprep.subr.mxu0 0.0
      %998 = vmatpush1.msra.mxu0 0.0
      %999 = vmatprep.subr.mxu0 0.0
      %1000 = vmatpush1.msra.mxu0 0.0
      %1001 = vmatprep.subr.mxu0 0.0
      %1002 = vmatpush1.msra.mxu0 0.0
      %1003 = vmatprep.subr.mxu0 0.0
      %1004 = vmatpush1.msra.mxu0 0.0
      %1005 = vmatprep.subr.mxu0 0.0
      %1006 = vmatpush1.msra.mxu0 0.0
      %1007 = vmatprep.subr.mxu0 0.0
      %1008 = vmatpush1.msra.mxu0 0.0
      %1009 = vmatprep.subr.mxu0 0.0
      %1010 = vmatpush1.msra.mxu0 0.0
      %1011 = vmatprep.subr.mxu0 0.0
      %1012 = vmatpush1.msra.mxu0 0.0
      %1013 = vmatprep.subr.mxu0 0.0
      %1014 = vmatpush1.msra.mxu0 0.0
      %1015 = vmatprep.subr.mxu0 0.0
      %1016 = vmatpush1.msra.mxu0 0.0
      %1017 = vmatprep.subr.mxu0 0.0
      %1018 = vmatpush1.msra.mxu0 0.0
      %1019 = vmatprep.subr.mxu0 0.0
      %1020 = vmatpush1.msra.mxu0 0.0
      %1021 = vmatprep.subr.mxu0 0.0
      %1022 = vmatpush1.msra.mxu0 0.0
      %1023 = vmatprep.subr.mxu0 0.0
      %1024 = vmatpush1.msra.mxu0 0.0
      %1025 = vmatprep.subr.mxu0 0.0
      %1026 = vmatpush1.msra.mxu0 0.0
      %1027 = vmatprep.subr.mxu0 0.0
      %1028 = vmatpush1.msra.mxu0 0.0
      %1029 = vmatprep.subr.mxu0 0.0
      %1030 = vmatpush1.msra.mxu0 0.0
      %1031 = vmatprep.subr.mxu0 0.0
      %1032 = vmatpush1.msra.mxu0 0.0
      %1033 = vmatprep.subr.mxu0 0.0
      %1034 = vmatpush1.msra.mxu0 0.0
      %1035 = vmatprep.subr.mxu0 0.0
      %1036 = vmatpush1.msra.mxu0 0.0
      %1037 = vmatprep.subr.mxu0 0.0
      %1038 = vmatpush1.msra.mxu0 0.0
      %1039 = vmatprep.subr.mxu0 0.0
      %1040 = vmatpush1.msra.mxu0 0.0
      %1041 = vmatprep.subr.mxu0 0.0
      %1042 = vmatpush1.msra.mxu0 0.0
      %1043 = vmatprep.mubr.f32.mxu0 0.0
      %1044 = vmatmul.mubr.f32.gmra.mrb[0].mxu0 %v420
      %v1045 = vpop.f32.mrb[0].mxu0
      %v1046 = vadd.f32 0.0, %v1045
      %v1047 = vpop.f32.mrb[0].mxu0
      %1048 = vmatprep.mubr.f32.mxu0 0.0
      %1049 = vmatmul.mubr.f32.gmra.mrb[0].mxu0 %v423
      %v1050 = vpop.f32.mrb[0].mxu0
      %v1051 = vadd.f32 0.0, %v1050
      %v1052 = vpop.f32.mrb[0].mxu0
      %1053 = vdwg.mxu0
      %1054 = vmatprep.subr.mxu0 0.0
      %1055 = vmatpush1.msra.mxu0 %v904
      %1056 = vmatprep.subr.mxu0 0.0
      %1057 = vmatpush1.msra.mxu0 %v905
      %1058 = vmatprep.subr.mxu0 0.0
      %1059 = vmatpush1.msra.mxu0 0.0
      %1060 = vmatprep.subr.mxu0 0.0
      %1061 = vmatpush1.msra.mxu0 0.0
      %1062 = vmatprep.subr.mxu0 0.0
      %1063 = vmatpush1.msra.mxu0 0.0
      %1064 = vmatprep.subr.mxu0 0.0
      %1065 = vmatpush1.msra.mxu0 0.0
      %1066 = vmatprep.subr.mxu0 0.0
      %1067 = vmatpush1.msra.mxu0 0.0
      %1068 = vmatprep.subr.mxu0 0.0
      %1069 = vmatpush1.msra.mxu0 0.0
      %1070 = vmatprep.subr.mxu0 0.0
      %1071 = vmatpush1.msra.mxu0 0.0
      %1072 = vmatprep.subr.mxu0 0.0
      %1073 = vmatpush1.msra.mxu0 0.0
      %1074 = vmatprep.subr.mxu0 0.0
      %1075 = vmatpush1.msra.mxu0 0.0
      %1076 = vmatprep.subr.mxu0 0.0
      %1077 = vmatpush1.msra.mxu0 0.0
      %1078 = vmatprep.subr.mxu0 0.0
      %1079 = vmatpush1.msra.mxu0 0.0
      %1080 = vmatprep.subr.mxu0 0.0
      %1081 = vmatpush1.msra.mxu0 0.0
      %1082 = vmatprep.subr.mxu0 0.0
      %1083 = vmatpush1.msra.mxu0 0.0
      %1084 = vmatprep.subr.mxu0 0.0
      %1085 = vmatpush1.msra.mxu0 0.0
      %1086 = vmatprep.subr.mxu0 0.0
      %1087 = vmatpush1.msra.mxu0 0.0
      %1088 = vmatprep.subr.mxu0 0.0
      %1089 = vmatpush1.msra.mxu0 0.0
      %1090 = vmatprep.subr.mxu0 0.0
      %1091 = vmatpush1.msra.mxu0 0.0
      %1092 = vmatprep.subr.mxu0 0.0
      %1093 = vmatpush1.msra.mxu0 0.0
      %1094 = vmatprep.subr.mxu0 0.0
      %1095 = vmatpush1.msra.mxu0 0.0
      %1096 = vmatprep.subr.mxu0 0.0
      %1097 = vmatpush1.msra.mxu0 0.0
      %1098 = vmatprep.subr.mxu0 0.0
      %1099 = vmatpush1.msra.mxu0 0.0
      %1100 = vmatprep.subr.mxu0 0.0
      %1101 = vmatpush1.msra.mxu0 0.0
      %1102 = vmatprep.subr.mxu0 0.0
      %1103 = vmatpush1.msra.mxu0 0.0
      %1104 = vmatprep.subr.mxu0 0.0
      %1105 = vmatpush1.msra.mxu0 0.0
      %1106 = vmatprep.subr.mxu0 0.0
      %1107 = vmatpush1.msra.mxu0 0.0
      %1108 = vmatprep.subr.mxu0 0.0
      %1109 = vmatpush1.msra.mxu0 0.0
      %1110 = vmatprep.subr.mxu0 0.0
      %1111 = vmatpush1.msra.mxu0 0.0
      %1112 = vmatprep.subr.mxu0 0.0
      %1113 = vmatpush1.msra.mxu0 0.0
      %1114 = vmatprep.subr.mxu0 0.0
      %1115 = vmatpush1.msra.mxu0 0.0
      %1116 = vmatprep.subr.mxu0 0.0
      %1117 = vmatpush1.msra.mxu0 0.0
      %1118 = vmatprep.mubr.f32.mxu0 0.0
      %1119 = vmatmul.mubr.f32.gmra.mrb[0].mxu0 %v501
      %v1120 = vpop.f32.mrb[0].mxu0
      %v1121 = vadd.f32 0.0, %v1120
      %v1122 = vpop.f32.mrb[0].mxu0
      %1123 = vmatprep.mubr.f32.mxu0 0.0
      %1124 = vmatmul.mubr.f32.gmra.mrb[0].mxu0 %v504
      %v1125 = vpop.f32.mrb[0].mxu0
      %v1126 = vadd.f32 0.0, %v1125
      %v1127 = vpop.f32.mrb[0].mxu0
      %1128 = vdwg.mxu0
      %s1129 = scalar_lea.vmem %s4, 16
      %v1130 = vld [vmem:[%s1129] sm:$0xf]
      %v1131 = vld [vmem:[%s1129 + $0x4] sm:$0xf]
      %v1132 = vld [vmem:[%s1129 + $0x8] sm:$0xf]
      %v1133 = vld [vmem:[%s1129 + $0xc] sm:$0xf]
      %v1134 = vpack.c.bf16 %v1051, %v1046
      %v1135 = vpack.c.bf16 %v1126, %v1121
      %v1140 = vunpack.c.l.b16 %v1130
      %v1141 = vunpack.c.l.b16 %v1131
      %v1142 = vunpack.c.l.b16 %v1132
      %v1143 = vunpack.c.l.b16 %v1133
      %v1144 = vpack.c.b16 %v1141, %v1140
      %v1145 = vpack.c.b16 %v1143, %v1142
      %v1149 = vsel %vm362, %v1134, 0
      %v1152 = vsel %vm362, %v1135, 0
      %1154 = vmatprep.subr.bf16.mxu0 0
      %1155 = vmatpush1.bf16.msra.mxu0 %v1144
      %1156 = vmatprep.subr.bf16.mxu0 0
      %1157 = vmatpush1.bf16.msra.mxu0 %v1145
      %1158 = vmatprep.subr.bf16.mxu0 0
      %1159 = vmatpush1.bf16.msra.mxu0 0
      %1160 = vmatprep.subr.bf16.mxu0 0
      %1161 = vmatpush1.bf16.msra.mxu0 0
      %1162 = vmatprep.subr.bf16.mxu0 0
      %1163 = vmatpush1.bf16.msra.mxu0 0
      %1164 = vmatprep.subr.bf16.mxu0 0
      %1165 = vmatpush1.bf16.msra.mxu0 0
      %1166 = vmatprep.subr.bf16.mxu0 0
      %1167 = vmatpush1.bf16.msra.mxu0 0
      %1168 = vmatprep.subr.bf16.mxu0 0
      %1169 = vmatpush1.bf16.msra.mxu0 0
      %1170 = vmatprep.subr.bf16.mxu0 0
      %1171 = vmatpush1.bf16.msra.mxu0 0
      %1172 = vmatprep.subr.bf16.mxu0 0
      %1173 = vmatpush1.bf16.msra.mxu0 0
      %1174 = vmatprep.subr.bf16.mxu0 0
      %1175 = vmatpush1.bf16.msra.mxu0 0
      %1176 = vmatprep.subr.bf16.mxu0 0
      %1177 = vmatpush1.bf16.msra.mxu0 0
      %1178 = vmatprep.subr.bf16.mxu0 0
      %1179 = vmatpush1.bf16.msra.mxu0 0
      %1180 = vmatprep.subr.bf16.mxu0 0
      %1181 = vmatpush1.bf16.msra.mxu0 0
      %1182 = vmatprep.subr.bf16.mxu0 0
      %1183 = vmatpush1.bf16.msra.mxu0 0
      %1184 = vmatprep.subr.bf16.mxu0 0
      %1185 = vmatpush1.bf16.msra.mxu0 0
      %1186 = vmatprep.mubr.bf16.mxu0 0
      %1187 = vmatmul.mubr.bf16.gmra.mrb[0].mxu0 %v1149
      %v1188 = vpop.f32.mrb[0].mxu0
      %v1189 = vadd.f32 0.0, %v1188
      %v1190 = vpop.f32.mrb[0].mxu0
      %v1191 = vpop.f32.mrb[0].mxu0
      %v1192 = vadd.f32 0.0, %v1191
      %v1193 = vpop.f32.mrb[0].mxu0
      %1194 = vmatprep.mubr.bf16.mxu0 0
      %1195 = vmatmul.mubr.bf16.gmra.mrb[0].mxu0 %v1152
      %v1196 = vpop.f32.mrb[0].mxu0
      %v1197 = vadd.f32 0.0, %v1196
      %v1198 = vpop.f32.mrb[0].mxu0
      %v1199 = vpop.f32.mrb[0].mxu0
      %v1200 = vadd.f32 0.0, %v1199
      %v1201 = vpop.f32.mrb[0].mxu0
      %1202 = vdwg.mxu0
      %v1203 = vadd.f32 %v965, %v1189
      %v1204 = vadd.f32 %v968, %v1192
      %v1205 = vadd.f32 %v973, %v1197
      %v1206 = vadd.f32 %v976, %v1200
      %1207 = vmatprep.subr.mxu0 0.0
      %1208 = vmatpush1.msra.mxu0 %v1046
      %1209 = vmatprep.subr.mxu0 0.0
      %1210 = vmatpush1.msra.mxu0 %v1051
      %1211 = vmatprep.subr.mxu0 0.0
      %1212 = vmatpush1.msra.mxu0 0.0
      %1213 = vmatprep.subr.mxu0 0.0
      %1214 = vmatpush1.msra.mxu0 0.0
      %1215 = vmatprep.subr.mxu0 0.0
      %1216 = vmatpush1.msra.mxu0 0.0
      %1217 = vmatprep.subr.mxu0 0.0
      %1218 = vmatpush1.msra.mxu0 0.0
      %1219 = vmatprep.subr.mxu0 0.0
      %1220 = vmatpush1.msra.mxu0 0.0
      %1221 = vmatprep.subr.mxu0 0.0
      %1222 = vmatpush1.msra.mxu0 0.0
      %1223 = vmatprep.subr.mxu0 0.0
      %1224 = vmatpush1.msra.mxu0 0.0
      %1225 = vmatprep.subr.mxu0 0.0
      %1226 = vmatpush1.msra.mxu0 0.0
      %1227 = vmatprep.subr.mxu0 0.0
      %1228 = vmatpush1.msra.mxu0 0.0
      %1229 = vmatprep.subr.mxu0 0.0
      %1230 = vmatpush1.msra.mxu0 0.0
      %1231 = vmatprep.subr.mxu0 0.0
      %1232 = vmatpush1.msra.mxu0 0.0
      %1233 = vmatprep.subr.mxu0 0.0
      %1234 = vmatpush1.msra.mxu0 0.0
      %1235 = vmatprep.subr.mxu0 0.0
      %1236 = vmatpush1.msra.mxu0 0.0
      %1237 = vmatprep.subr.mxu0 0.0
      %1238 = vmatpush1.msra.mxu0 0.0
      %1239 = vmatprep.subr.mxu0 0.0
      %1240 = vmatpush1.msra.mxu0 0.0
      %1241 = vmatprep.subr.mxu0 0.0
      %1242 = vmatpush1.msra.mxu0 0.0
      %1243 = vmatprep.subr.mxu0 0.0
      %1244 = vmatpush1.msra.mxu0 0.0
      %1245 = vmatprep.subr.mxu0 0.0
      %1246 = vmatpush1.msra.mxu0 0.0
      %1247 = vmatprep.subr.mxu0 0.0
      %1248 = vmatpush1.msra.mxu0 0.0
      %1249 = vmatprep.subr.mxu0 0.0
      %1250 = vmatpush1.msra.mxu0 0.0
      %1251 = vmatprep.subr.mxu0 0.0
      %1252 = vmatpush1.msra.mxu0 0.0
      %1253 = vmatprep.subr.mxu0 0.0
      %1254 = vmatpush1.msra.mxu0 0.0
      %1255 = vmatprep.subr.mxu0 0.0
      %1256 = vmatpush1.msra.mxu0 0.0
      %1257 = vmatprep.subr.mxu0 0.0
      %1258 = vmatpush1.msra.mxu0 0.0
      %1259 = vmatprep.subr.mxu0 0.0
      %1260 = vmatpush1.msra.mxu0 0.0
      %1261 = vmatprep.subr.mxu0 0.0
      %1262 = vmatpush1.msra.mxu0 0.0
      %1263 = vmatprep.subr.mxu0 0.0
      %1264 = vmatpush1.msra.mxu0 0.0
      %1265 = vmatprep.subr.mxu0 0.0
      %1266 = vmatpush1.msra.mxu0 0.0
      %1267 = vmatprep.subr.mxu0 0.0
      %1268 = vmatpush1.msra.mxu0 0.0
      %1269 = vmatprep.subr.mxu0 0.0
      %1270 = vmatpush1.msra.mxu0 0.0
      %1271 = vmatprep.mubr.f32.mxu0 0.0
      %1272 = vmatmul.mubr.f32.gmra.mrb[0].mxu0 %v420
      %v1273 = vpop.f32.mrb[0].mxu0
      %v1274 = vadd.f32 0.0, %v1273
      %v1275 = vpop.f32.mrb[0].mxu0
      %1276 = vmatprep.mubr.f32.mxu0 0.0
      %1277 = vmatmul.mubr.f32.gmra.mrb[0].mxu0 %v423
      %v1278 = vpop.f32.mrb[0].mxu0
      %v1279 = vadd.f32 0.0, %v1278
      %v1280 = vpop.f32.mrb[0].mxu0
      %1281 = vdwg.mxu0
      %1282 = vmatprep.subr.mxu0 0.0
      %1283 = vmatpush1.msra.mxu0 %v1121
      %1284 = vmatprep.subr.mxu0 0.0
      %1285 = vmatpush1.msra.mxu0 %v1126
      %1286 = vmatprep.subr.mxu0 0.0
      %1287 = vmatpush1.msra.mxu0 0.0
      %1288 = vmatprep.subr.mxu0 0.0
      %1289 = vmatpush1.msra.mxu0 0.0
      %1290 = vmatprep.subr.mxu0 0.0
      %1291 = vmatpush1.msra.mxu0 0.0
      %1292 = vmatprep.subr.mxu0 0.0
      %1293 = vmatpush1.msra.mxu0 0.0
      %1294 = vmatprep.subr.mxu0 0.0
      %1295 = vmatpush1.msra.mxu0 0.0
      %1296 = vmatprep.subr.mxu0 0.0
      %1297 = vmatpush1.msra.mxu0 0.0
      %1298 = vmatprep.subr.mxu0 0.0
      %1299 = vmatpush1.msra.mxu0 0.0
      %1300 = vmatprep.subr.mxu0 0.0
      %1301 = vmatpush1.msra.mxu0 0.0
      %1302 = vmatprep.subr.mxu0 0.0
      %1303 = vmatpush1.msra.mxu0 0.0
      %1304 = vmatprep.subr.mxu0 0.0
      %1305 = vmatpush1.msra.mxu0 0.0
      %1306 = vmatprep.subr.mxu0 0.0
      %1307 = vmatpush1.msra.mxu0 0.0
      %1308 = vmatprep.subr.mxu0 0.0
      %1309 = vmatpush1.msra.mxu0 0.0
      %1310 = vmatprep.subr.mxu0 0.0
      %1311 = vmatpush1.msra.mxu0 0.0
      %1312 = vmatprep.subr.mxu0 0.0
      %1313 = vmatpush1.msra.mxu0 0.0
      %1314 = vmatprep.subr.mxu0 0.0
      %1315 = vmatpush1.msra.mxu0 0.0
      %1316 = vmatprep.subr.mxu0 0.0
      %1317 = vmatpush1.msra.mxu0 0.0
      %1318 = vmatprep.subr.mxu0 0.0
      %1319 = vmatpush1.msra.mxu0 0.0
      %1320 = vmatprep.subr.mxu0 0.0
      %1321 = vmatpush1.msra.mxu0 0.0
      %1322 = vmatprep.subr.mxu0 0.0
      %1323 = vmatpush1.msra.mxu0 0.0
      %1324 = vmatprep.subr.mxu0 0.0
      %1325 = vmatpush1.msra.mxu0 0.0
      %1326 = vmatprep.subr.mxu0 0.0
      %1327 = vmatpush1.msra.mxu0 0.0
      %1328 = vmatprep.subr.mxu0 0.0
      %1329 = vmatpush1.msra.mxu0 0.0
      %1330 = vmatprep.subr.mxu0 0.0
      %1331 = vmatpush1.msra.mxu0 0.0
      %1332 = vmatprep.subr.mxu0 0.0
      %1333 = vmatpush1.msra.mxu0 0.0
      %1334 = vmatprep.subr.mxu0 0.0
      %1335 = vmatpush1.msra.mxu0 0.0
      %1336 = vmatprep.subr.mxu0 0.0
      %1337 = vmatpush1.msra.mxu0 0.0
      %1338 = vmatprep.subr.mxu0 0.0
      %1339 = vmatpush1.msra.mxu0 0.0
      %1340 = vmatprep.subr.mxu0 0.0
      %1341 = vmatpush1.msra.mxu0 0.0
      %1342 = vmatprep.subr.mxu0 0.0
      %1343 = vmatpush1.msra.mxu0 0.0
      %1344 = vmatprep.subr.mxu0 0.0
      %1345 = vmatpush1.msra.mxu0 0.0
      %1346 = vmatprep.mubr.f32.mxu0 0.0
      %1347 = vmatmul.mubr.f32.gmra.mrb[0].mxu0 %v501
      %v1348 = vpop.f32.mrb[0].mxu0
      %v1349 = vadd.f32 0.0, %v1348
      %v1350 = vpop.f32.mrb[0].mxu0
      %1351 = vmatprep.mubr.f32.mxu0 0.0
      %1352 = vmatmul.mubr.f32.gmra.mrb[0].mxu0 %v504
      %v1353 = vpop.f32.mrb[0].mxu0
      %v1354 = vadd.f32 0.0, %v1353
      %v1355 = vpop.f32.mrb[0].mxu0
      %1356 = vdwg.mxu0
      %v1357 = vmul.f32 %v1274, 2.0
      %v1358 = vmul.f32 %v1279, 2.0
      %v1359 = vmul.f32 %v1349, 2.0
      %v1360 = vmul.f32 %v1354, 2.0
      %v1361 = vsub.f32 %v1357, %v902
      %v1362 = vsub.f32 %v1358, %v903
      %v1363 = vsub.f32 %v1359, %v904
      %v1364 = vsub.f32 %v1360, %v905
      %s1365 = scalar_lea.vmem %s4, 32
      %v1366 = vld [vmem:[%s1365] sm:$0xf]
      %v1367 = vld [vmem:[%s1365 + $0x4] sm:$0xf]
      %v1368 = vld [vmem:[%s1365 + $0x8] sm:$0xf]
      %v1369 = vld [vmem:[%s1365 + $0xc] sm:$0xf]
      %v1370 = vpack.c.bf16 %v1362, %v1361
      %v1371 = vpack.c.bf16 %v1364, %v1363
      %v1376 = vunpack.c.l.b16 %v1366
      %v1377 = vunpack.c.l.b16 %v1367
      %v1378 = vunpack.c.l.b16 %v1368
      %v1379 = vunpack.c.l.b16 %v1369
      %v1380 = vpack.c.b16 %v1377, %v1376
      %v1381 = vpack.c.b16 %v1379, %v1378
      %v1385 = vsel %vm362, %v1370, 0
      %v1388 = vsel %vm362, %v1371, 0
      %1390 = vmatprep.subr.bf16.mxu0 0
      %1391 = vmatpush1.bf16.msra.mxu0 %v1380
      %1392 = vmatprep.subr.bf16.mxu0 0
      %1393 = vmatpush1.bf16.msra.mxu0 %v1381
      %1394 = vmatprep.subr.bf16.mxu0 0
      %1395 = vmatpush1.bf16.msra.mxu0 0
      %1396 = vmatprep.subr.bf16.mxu0 0
      %1397 = vmatpush1.bf16.msra.mxu0 0
      %1398 = vmatprep.subr.bf16.mxu0 0
      %1399 = vmatpush1.bf16.msra.mxu0 0
      %1400 = vmatprep.subr.bf16.mxu0 0
      %1401 = vmatpush1.bf16.msra.mxu0 0
      %1402 = vmatprep.subr.bf16.mxu0 0
      %1403 = vmatpush1.bf16.msra.mxu0 0
      %1404 = vmatprep.subr.bf16.mxu0 0
      %1405 = vmatpush1.bf16.msra.mxu0 0
      %1406 = vmatprep.subr.bf16.mxu0 0
      %1407 = vmatpush1.bf16.msra.mxu0 0
      %1408 = vmatprep.subr.bf16.mxu0 0
      %1409 = vmatpush1.bf16.msra.mxu0 0
      %1410 = vmatprep.subr.bf16.mxu0 0
      %1411 = vmatpush1.bf16.msra.mxu0 0
      %1412 = vmatprep.subr.bf16.mxu0 0
      %1413 = vmatpush1.bf16.msra.mxu0 0
      %1414 = vmatprep.subr.bf16.mxu0 0
      %1415 = vmatpush1.bf16.msra.mxu0 0
      %1416 = vmatprep.subr.bf16.mxu0 0
      %1417 = vmatpush1.bf16.msra.mxu0 0
      %1418 = vmatprep.subr.bf16.mxu0 0
      %1419 = vmatpush1.bf16.msra.mxu0 0
      %1420 = vmatprep.subr.bf16.mxu0 0
      %1421 = vmatpush1.bf16.msra.mxu0 0
      %1422 = vmatprep.mubr.bf16.mxu0 0
      %1423 = vmatmul.mubr.bf16.gmra.mrb[0].mxu0 %v1385
      %v1424 = vpop.f32.mrb[0].mxu0
      %v1425 = vadd.f32 0.0, %v1424
      %v1426 = vpop.f32.mrb[0].mxu0
      %v1427 = vpop.f32.mrb[0].mxu0
      %v1428 = vadd.f32 0.0, %v1427
      %v1429 = vpop.f32.mrb[0].mxu0
      %1430 = vmatprep.mubr.bf16.mxu0 0
      %1431 = vmatmul.mubr.bf16.gmra.mrb[0].mxu0 %v1388
      %v1432 = vpop.f32.mrb[0].mxu0
      %v1433 = vadd.f32 0.0, %v1432
      %v1434 = vpop.f32.mrb[0].mxu0
      %v1435 = vpop.f32.mrb[0].mxu0
      %v1436 = vadd.f32 0.0, %v1435
      %v1437 = vpop.f32.mrb[0].mxu0
      %1438 = vdwg.mxu0
      %v1439 = vadd.f32 %v1203, %v1425
      %v1440 = vadd.f32 %v1204, %v1428
      %v1441 = vadd.f32 %v1205, %v1433
      %v1442 = vadd.f32 %v1206, %v1436
      %v1443 = vld [vmem:[%s5] sm:$0x1]
      %v1445 = vlaneseq
      %v1446 = vshrl.u32 %v1445, 7
      %v1447 = vsub.s32 0, %v1446
      %v1448 = vrot.slane %v1443, %v1447
      %v1450 = vadd.f32 %v1439, %v1448
      %v1451 = vadd.f32 %v1440, %v1448
      %v1452 = vadd.f32 %v1441, %v1448
      %v1453 = vadd.f32 %v1442, %v1448
      %v1454 = vld [vmem:[%s6] sm:$0xf]
      %v1455 = vld [vmem:[%s6 + $0x4] sm:$0xf]
      %v1456 = vld [vmem:[%s6 + $0x8] sm:$0xf]
      %v1457 = vld [vmem:[%s6 + $0xc] sm:$0xf]
      %v1458 = vld [vmem:[%s6 + $0x10] sm:$0xf]
      %v1459 = vld [vmem:[%s6 + $0x14] sm:$0xf]
      %v1460 = vld [vmem:[%s6 + $0x18] sm:$0xf]
      %v1461 = vld [vmem:[%s6 + $0x1c] sm:$0xf]
      %v1462 = vpack.c.bf16 %v1451, %v1450
      %v1463 = vpack.c.bf16 %v1453, %v1452
      %v1472 = vunpack.c.l.b16 %v1454
      %v1473 = vunpack.c.l.b16 %v1455
      %v1474 = vunpack.c.l.b16 %v1456
      %v1475 = vunpack.c.l.b16 %v1457
      %v1476 = vunpack.c.l.b16 %v1458
      %v1477 = vunpack.c.l.b16 %v1459
      %v1478 = vunpack.c.l.b16 %v1460
      %v1479 = vunpack.c.l.b16 %v1461
      %v1480 = vpack.c.b16 %v1473, %v1472
      %v1481 = vpack.c.b16 %v1475, %v1474
      %v1482 = vpack.c.b16 %v1477, %v1476
      %v1483 = vpack.c.b16 %v1479, %v1478
      %vm1488 = vcmask 523264
      %v1490 = vsel %vm1488, %v1462, 0
      %v1493 = vsel %vm1488, %v1463, 0
      %1495 = vmatprep.subr.bf16.mxu0 0
      %1496 = vmatpush1.bf16.msra.mxu0 %v1480
      %1497 = vmatprep.subr.bf16.mxu0 0
      %1498 = vmatpush1.bf16.msra.mxu0 %v1481
      %1499 = vmatprep.subr.bf16.mxu0 0
      %1500 = vmatpush1.bf16.msra.mxu0 %v1482
      %1501 = vmatprep.subr.bf16.mxu0 0
      %1502 = vmatpush1.bf16.msra.mxu0 %v1483
      %1503 = vmatprep.subr.bf16.mxu0 0
      %1504 = vmatpush1.bf16.msra.mxu0 0
      %1505 = vmatprep.subr.bf16.mxu0 0
      %1506 = vmatpush1.bf16.msra.mxu0 0
      %1507 = vmatprep.subr.bf16.mxu0 0
      %1508 = vmatpush1.bf16.msra.mxu0 0
      %1509 = vmatprep.subr.bf16.mxu0 0
      %1510 = vmatpush1.bf16.msra.mxu0 0
      %1511 = vmatprep.subr.bf16.mxu0 0
      %1512 = vmatpush1.bf16.msra.mxu0 0
      %1513 = vmatprep.subr.bf16.mxu0 0
      %1514 = vmatpush1.bf16.msra.mxu0 0
      %1515 = vmatprep.subr.bf16.mxu0 0
      %1516 = vmatpush1.bf16.msra.mxu0 0
      %1517 = vmatprep.subr.bf16.mxu0 0
      %1518 = vmatpush1.bf16.msra.mxu0 0
      %1519 = vmatprep.subr.bf16.mxu0 0
      %1520 = vmatpush1.bf16.msra.mxu0 0
      %1521 = vmatprep.subr.bf16.mxu0 0
      %1522 = vmatpush1.bf16.msra.mxu0 0
      %1523 = vmatprep.subr.bf16.mxu0 0
      %1524 = vmatpush1.bf16.msra.mxu0 0
      %1525 = vmatprep.subr.bf16.mxu0 0
      %1526 = vmatpush1.bf16.msra.mxu0 0
      %1527 = vmatprep.mubr.bf16.mxu0 0
      %1528 = vmatmul.mubr.bf16.gmra.mrb[0].mxu0 %v1490
      %v1529 = vpop.f32.mrb[0].mxu0
      %v1530 = vadd.f32 0.0, %v1529
      %v1531 = vpop.f32.mrb[0].mxu0
      %v1532 = vpop.f32.mrb[0].mxu0
      %v1533 = vadd.f32 0.0, %v1532
      %v1534 = vpop.f32.mrb[0].mxu0
      %1535 = vmatprep.mubr.bf16.mxu0 0
      %1536 = vmatmul.mubr.bf16.gmra.mrb[0].mxu0 %v1493
      %v1537 = vpop.f32.mrb[0].mxu0
      %v1538 = vadd.f32 0.0, %v1537
      %v1539 = vpop.f32.mrb[0].mxu0
      %v1540 = vpop.f32.mrb[0].mxu0
      %v1541 = vadd.f32 0.0, %v1540
      %v1542 = vpop.f32.mrb[0].mxu0
      %1543 = vdwg.mxu0
      %1544 = vmatprep.subr.mxu0 0.0
      %1545 = vmatpush1.msra.mxu0 %v1450
      %1546 = vmatprep.subr.mxu0 0.0
      %1547 = vmatpush1.msra.mxu0 %v1451
      %1548 = vmatprep.subr.mxu0 0.0
      %1549 = vmatpush1.msra.mxu0 0.0
      %1550 = vmatprep.subr.mxu0 0.0
      %1551 = vmatpush1.msra.mxu0 0.0
      %1552 = vmatprep.subr.mxu0 0.0
      %1553 = vmatpush1.msra.mxu0 0.0
      %1554 = vmatprep.subr.mxu0 0.0
      %1555 = vmatpush1.msra.mxu0 0.0
      %1556 = vmatprep.subr.mxu0 0.0
      %1557 = vmatpush1.msra.mxu0 0.0
      %1558 = vmatprep.subr.mxu0 0.0
      %1559 = vmatpush1.msra.mxu0 0.0
      %1560 = vmatprep.subr.mxu0 0.0
      %1561 = vmatpush1.msra.mxu0 0.0
      %1562 = vmatprep.subr.mxu0 0.0
      %1563 = vmatpush1.msra.mxu0 0.0
      %1564 = vmatprep.subr.mxu0 0.0
      %1565 = vmatpush1.msra.mxu0 0.0
      %1566 = vmatprep.subr.mxu0 0.0
      %1567 = vmatpush1.msra.mxu0 0.0
      %1568 = vmatprep.subr.mxu0 0.0
      %1569 = vmatpush1.msra.mxu0 0.0
      %1570 = vmatprep.subr.mxu0 0.0
      %1571 = vmatpush1.msra.mxu0 0.0
      %1572 = vmatprep.subr.mxu0 0.0
      %1573 = vmatpush1.msra.mxu0 0.0
      %1574 = vmatprep.subr.mxu0 0.0
      %1575 = vmatpush1.msra.mxu0 0.0
      %1576 = vmatprep.subr.mxu0 0.0
      %1577 = vmatpush1.msra.mxu0 0.0
      %1578 = vmatprep.subr.mxu0 0.0
      %1579 = vmatpush1.msra.mxu0 0.0
      %1580 = vmatprep.subr.mxu0 0.0
      %1581 = vmatpush1.msra.mxu0 0.0
      %1582 = vmatprep.subr.mxu0 0.0
      %1583 = vmatpush1.msra.mxu0 0.0
      %1584 = vmatprep.subr.mxu0 0.0
      %1585 = vmatpush1.msra.mxu0 0.0
      %1586 = vmatprep.subr.mxu0 0.0
      %1587 = vmatpush1.msra.mxu0 0.0
      %1588 = vmatprep.subr.mxu0 0.0
      %1589 = vmatpush1.msra.mxu0 0.0
      %1590 = vmatprep.subr.mxu0 0.0
      %1591 = vmatpush1.msra.mxu0 0.0
      %1592 = vmatprep.subr.mxu0 0.0
      %1593 = vmatpush1.msra.mxu0 0.0
      %1594 = vmatprep.subr.mxu0 0.0
      %1595 = vmatpush1.msra.mxu0 0.0
      %1596 = vmatprep.subr.mxu0 0.0
      %1597 = vmatpush1.msra.mxu0 0.0
      %1598 = vmatprep.subr.mxu0 0.0
      %1599 = vmatpush1.msra.mxu0 0.0
      %1600 = vmatprep.subr.mxu0 0.0
      %1601 = vmatpush1.msra.mxu0 0.0
      %1602 = vmatprep.subr.mxu0 0.0
      %1603 = vmatpush1.msra.mxu0 0.0
      %1604 = vmatprep.subr.mxu0 0.0
      %1605 = vmatpush1.msra.mxu0 0.0
      %1606 = vmatprep.subr.mxu0 0.0
      %1607 = vmatpush1.msra.mxu0 0.0
      %1608 = vmatprep.mubr.f32.mxu0 0.0
      %1609 = vmatmul.mubr.f32.gmra.mrb[0].mxu0 %v420
      %v1610 = vpop.f32.mrb[0].mxu0
      %v1611 = vadd.f32 0.0, %v1610
      %v1612 = vpop.f32.mrb[0].mxu0
      %1613 = vmatprep.mubr.f32.mxu0 0.0
      %1614 = vmatmul.mubr.f32.gmra.mrb[0].mxu0 %v423
      %v1615 = vpop.f32.mrb[0].mxu0
      %v1616 = vadd.f32 0.0, %v1615
      %v1617 = vpop.f32.mrb[0].mxu0
      %1618 = vdwg.mxu0
      %1619 = vmatprep.subr.mxu0 0.0
      %1620 = vmatpush1.msra.mxu0 %v1452
      %1621 = vmatprep.subr.mxu0 0.0
      %1622 = vmatpush1.msra.mxu0 %v1453
      %1623 = vmatprep.subr.mxu0 0.0
      %1624 = vmatpush1.msra.mxu0 0.0
      %1625 = vmatprep.subr.mxu0 0.0
      %1626 = vmatpush1.msra.mxu0 0.0
      %1627 = vmatprep.subr.mxu0 0.0
      %1628 = vmatpush1.msra.mxu0 0.0
      %1629 = vmatprep.subr.mxu0 0.0
      %1630 = vmatpush1.msra.mxu0 0.0
      %1631 = vmatprep.subr.mxu0 0.0
      %1632 = vmatpush1.msra.mxu0 0.0
      %1633 = vmatprep.subr.mxu0 0.0
      %1634 = vmatpush1.msra.mxu0 0.0
      %1635 = vmatprep.subr.mxu0 0.0
      %1636 = vmatpush1.msra.mxu0 0.0
      %1637 = vmatprep.subr.mxu0 0.0
      %1638 = vmatpush1.msra.mxu0 0.0
      %1639 = vmatprep.subr.mxu0 0.0
      %1640 = vmatpush1.msra.mxu0 0.0
      %1641 = vmatprep.subr.mxu0 0.0
      %1642 = vmatpush1.msra.mxu0 0.0
      %1643 = vmatprep.subr.mxu0 0.0
      %1644 = vmatpush1.msra.mxu0 0.0
      %1645 = vmatprep.subr.mxu0 0.0
      %1646 = vmatpush1.msra.mxu0 0.0
      %1647 = vmatprep.subr.mxu0 0.0
      %1648 = vmatpush1.msra.mxu0 0.0
      %1649 = vmatprep.subr.mxu0 0.0
      %1650 = vmatpush1.msra.mxu0 0.0
      %1651 = vmatprep.subr.mxu0 0.0
      %1652 = vmatpush1.msra.mxu0 0.0
      %1653 = vmatprep.subr.mxu0 0.0
      %1654 = vmatpush1.msra.mxu0 0.0
      %1655 = vmatprep.subr.mxu0 0.0
      %1656 = vmatpush1.msra.mxu0 0.0
      %1657 = vmatprep.subr.mxu0 0.0
      %1658 = vmatpush1.msra.mxu0 0.0
      %1659 = vmatprep.subr.mxu0 0.0
      %1660 = vmatpush1.msra.mxu0 0.0
      %1661 = vmatprep.subr.mxu0 0.0
      %1662 = vmatpush1.msra.mxu0 0.0
      %1663 = vmatprep.subr.mxu0 0.0
      %1664 = vmatpush1.msra.mxu0 0.0
      %1665 = vmatprep.subr.mxu0 0.0
      %1666 = vmatpush1.msra.mxu0 0.0
      %1667 = vmatprep.subr.mxu0 0.0
      %1668 = vmatpush1.msra.mxu0 0.0
      %1669 = vmatprep.subr.mxu0 0.0
      %1670 = vmatpush1.msra.mxu0 0.0
      %1671 = vmatprep.subr.mxu0 0.0
      %1672 = vmatpush1.msra.mxu0 0.0
      %1673 = vmatprep.subr.mxu0 0.0
      %1674 = vmatpush1.msra.mxu0 0.0
      %1675 = vmatprep.subr.mxu0 0.0
      %1676 = vmatpush1.msra.mxu0 0.0
      %1677 = vmatprep.subr.mxu0 0.0
      %1678 = vmatpush1.msra.mxu0 0.0
      %1679 = vmatprep.subr.mxu0 0.0
      %1680 = vmatpush1.msra.mxu0 0.0
      %1681 = vmatprep.subr.mxu0 0.0
      %1682 = vmatpush1.msra.mxu0 0.0
      %1683 = vmatprep.mubr.f32.mxu0 0.0
      %1684 = vmatmul.mubr.f32.gmra.mrb[0].mxu0 %v501
      %v1685 = vpop.f32.mrb[0].mxu0
      %v1686 = vadd.f32 0.0, %v1685
      %v1687 = vpop.f32.mrb[0].mxu0
      %1688 = vmatprep.mubr.f32.mxu0 0.0
      %1689 = vmatmul.mubr.f32.gmra.mrb[0].mxu0 %v504
      %v1690 = vpop.f32.mrb[0].mxu0
      %v1691 = vadd.f32 0.0, %v1690
      %v1692 = vpop.f32.mrb[0].mxu0
      %1693 = vdwg.mxu0
      %s1694 = scalar_lea.vmem %s6, 32
      %v1695 = vld [vmem:[%s1694] sm:$0xf]
      %v1696 = vld [vmem:[%s1694 + $0x4] sm:$0xf]
      %v1697 = vld [vmem:[%s1694 + $0x8] sm:$0xf]
      %v1698 = vld [vmem:[%s1694 + $0xc] sm:$0xf]
      %v1699 = vld [vmem:[%s1694 + $0x10] sm:$0xf]
      %v1700 = vld [vmem:[%s1694 + $0x14] sm:$0xf]
      %v1701 = vld [vmem:[%s1694 + $0x18] sm:$0xf]
      %v1702 = vld [vmem:[%s1694 + $0x1c] sm:$0xf]
      %v1703 = vpack.c.bf16 %v1616, %v1611
      %v1704 = vpack.c.bf16 %v1691, %v1686
      %v1713 = vunpack.c.l.b16 %v1695
      %v1714 = vunpack.c.l.b16 %v1696
      %v1715 = vunpack.c.l.b16 %v1697
      %v1716 = vunpack.c.l.b16 %v1698
      %v1717 = vunpack.c.l.b16 %v1699
      %v1718 = vunpack.c.l.b16 %v1700
      %v1719 = vunpack.c.l.b16 %v1701
      %v1720 = vunpack.c.l.b16 %v1702
      %v1721 = vpack.c.b16 %v1714, %v1713
      %v1722 = vpack.c.b16 %v1716, %v1715
      %v1723 = vpack.c.b16 %v1718, %v1717
      %v1724 = vpack.c.b16 %v1720, %v1719
      %v1730 = vsel %vm1488, %v1703, 0
      %v1733 = vsel %vm1488, %v1704, 0
      %1735 = vmatprep.subr.bf16.mxu0 0
      %1736 = vmatpush1.bf16.msra.mxu0 %v1721
      %1737 = vmatprep.subr.bf16.mxu0 0
      %1738 = vmatpush1.bf16.msra.mxu0 %v1722
      %1739 = vmatprep.subr.bf16.mxu0 0
      %1740 = vmatpush1.bf16.msra.mxu0 %v1723
      %1741 = vmatprep.subr.bf16.mxu0 0
      %1742 = vmatpush1.bf16.msra.mxu0 %v1724
      %1743 = vmatprep.subr.bf16.mxu0 0
      %1744 = vmatpush1.bf16.msra.mxu0 0
      %1745 = vmatprep.subr.bf16.mxu0 0
      %1746 = vmatpush1.bf16.msra.mxu0 0
      %1747 = vmatprep.subr.bf16.mxu0 0
      %1748 = vmatpush1.bf16.msra.mxu0 0
      %1749 = vmatprep.subr.bf16.mxu0 0
      %1750 = vmatpush1.bf16.msra.mxu0 0
      %1751 = vmatprep.subr.bf16.mxu0 0
      %1752 = vmatpush1.bf16.msra.mxu0 0
      %1753 = vmatprep.subr.bf16.mxu0 0
      %1754 = vmatpush1.bf16.msra.mxu0 0
      %1755 = vmatprep.subr.bf16.mxu0 0
      %1756 = vmatpush1.bf16.msra.mxu0 0
      %1757 = vmatprep.subr.bf16.mxu0 0
      %1758 = vmatpush1.bf16.msra.mxu0 0
      %1759 = vmatprep.subr.bf16.mxu0 0
      %1760 = vmatpush1.bf16.msra.mxu0 0
      %1761 = vmatprep.subr.bf16.mxu0 0
      %1762 = vmatpush1.bf16.msra.mxu0 0
      %1763 = vmatprep.subr.bf16.mxu0 0
      %1764 = vmatpush1.bf16.msra.mxu0 0
      %1765 = vmatprep.subr.bf16.mxu0 0
      %1766 = vmatpush1.bf16.msra.mxu0 0
      %1767 = vmatprep.mubr.bf16.mxu0 0
      %1768 = vmatmul.mubr.bf16.gmra.mrb[0].mxu0 %v1730
      %v1769 = vpop.f32.mrb[0].mxu0
      %v1770 = vadd.f32 0.0, %v1769
      %v1771 = vpop.f32.mrb[0].mxu0
      %v1772 = vpop.f32.mrb[0].mxu0
      %v1773 = vadd.f32 0.0, %v1772
      %v1774 = vpop.f32.mrb[0].mxu0
      %1775 = vmatprep.mubr.bf16.mxu0 0
      %1776 = vmatmul.mubr.bf16.gmra.mrb[0].mxu0 %v1733
      %v1777 = vpop.f32.mrb[0].mxu0
      %v1778 = vadd.f32 0.0, %v1777
      %v1779 = vpop.f32.mrb[0].mxu0
      %v1780 = vpop.f32.mrb[0].mxu0
      %v1781 = vadd.f32 0.0, %v1780
      %v1782 = vpop.f32.mrb[0].mxu0
      %1783 = vdwg.mxu0
      %v1784 = vadd.f32 %v1530, %v1770
      %v1785 = vadd.f32 %v1533, %v1773
      %v1786 = vadd.f32 %v1538, %v1778
      %v1787 = vadd.f32 %v1541, %v1781
      %1788 = vmatprep.subr.mxu0 0.0
      %1789 = vmatpush1.msra.mxu0 %v1611
      %1790 = vmatprep.subr.mxu0 0.0
      %1791 = vmatpush1.msra.mxu0 %v1616
      %1792 = vmatprep.subr.mxu0 0.0
      %1793 = vmatpush1.msra.mxu0 0.0
      %1794 = vmatprep.subr.mxu0 0.0
      %1795 = vmatpush1.msra.mxu0 0.0
      %1796 = vmatprep.subr.mxu0 0.0
      %1797 = vmatpush1.msra.mxu0 0.0
      %1798 = vmatprep.subr.mxu0 0.0
      %1799 = vmatpush1.msra.mxu0 0.0
      %1800 = vmatprep.subr.mxu0 0.0
      %1801 = vmatpush1.msra.mxu0 0.0
      %1802 = vmatprep.subr.mxu0 0.0
      %1803 = vmatpush1.msra.mxu0 0.0
      %1804 = vmatprep.subr.mxu0 0.0
      %1805 = vmatpush1.msra.mxu0 0.0
      %1806 = vmatprep.subr.mxu0 0.0
      %1807 = vmatpush1.msra.mxu0 0.0
      %1808 = vmatprep.subr.mxu0 0.0
      %1809 = vmatpush1.msra.mxu0 0.0
      %1810 = vmatprep.subr.mxu0 0.0
      %1811 = vmatpush1.msra.mxu0 0.0
      %1812 = vmatprep.subr.mxu0 0.0
      %1813 = vmatpush1.msra.mxu0 0.0
      %1814 = vmatprep.subr.mxu0 0.0
      %1815 = vmatpush1.msra.mxu0 0.0
      %1816 = vmatprep.subr.mxu0 0.0
      %1817 = vmatpush1.msra.mxu0 0.0
      %1818 = vmatprep.subr.mxu0 0.0
      %1819 = vmatpush1.msra.mxu0 0.0
      %1820 = vmatprep.subr.mxu0 0.0
      %1821 = vmatpush1.msra.mxu0 0.0
      %1822 = vmatprep.subr.mxu0 0.0
      %1823 = vmatpush1.msra.mxu0 0.0
      %1824 = vmatprep.subr.mxu0 0.0
      %1825 = vmatpush1.msra.mxu0 0.0
      %1826 = vmatprep.subr.mxu0 0.0
      %1827 = vmatpush1.msra.mxu0 0.0
      %1828 = vmatprep.subr.mxu0 0.0
      %1829 = vmatpush1.msra.mxu0 0.0
      %1830 = vmatprep.subr.mxu0 0.0
      %1831 = vmatpush1.msra.mxu0 0.0
      %1832 = vmatprep.subr.mxu0 0.0
      %1833 = vmatpush1.msra.mxu0 0.0
      %1834 = vmatprep.subr.mxu0 0.0
      %1835 = vmatpush1.msra.mxu0 0.0
      %1836 = vmatprep.subr.mxu0 0.0
      %1837 = vmatpush1.msra.mxu0 0.0
      %1838 = vmatprep.subr.mxu0 0.0
      %1839 = vmatpush1.msra.mxu0 0.0
      %1840 = vmatprep.subr.mxu0 0.0
      %1841 = vmatpush1.msra.mxu0 0.0
      %1842 = vmatprep.subr.mxu0 0.0
      %1843 = vmatpush1.msra.mxu0 0.0
      %1844 = vmatprep.subr.mxu0 0.0
      %1845 = vmatpush1.msra.mxu0 0.0
      %1846 = vmatprep.subr.mxu0 0.0
      %1847 = vmatpush1.msra.mxu0 0.0
      %1848 = vmatprep.subr.mxu0 0.0
      %1849 = vmatpush1.msra.mxu0 0.0
      %1850 = vmatprep.subr.mxu0 0.0
      %1851 = vmatpush1.msra.mxu0 0.0
      %1852 = vmatprep.mubr.f32.mxu0 0.0
      %1853 = vmatmul.mubr.f32.gmra.mrb[0].mxu0 %v420
      %v1854 = vpop.f32.mrb[0].mxu0
      %v1855 = vadd.f32 0.0, %v1854
      %v1856 = vpop.f32.mrb[0].mxu0
      %1857 = vmatprep.mubr.f32.mxu0 0.0
      %1858 = vmatmul.mubr.f32.gmra.mrb[0].mxu0 %v423
      %v1859 = vpop.f32.mrb[0].mxu0
      %v1860 = vadd.f32 0.0, %v1859
      %v1861 = vpop.f32.mrb[0].mxu0
      %1862 = vdwg.mxu0
      %1863 = vmatprep.subr.mxu0 0.0
      %1864 = vmatpush1.msra.mxu0 %v1686
      %1865 = vmatprep.subr.mxu0 0.0
      %1866 = vmatpush1.msra.mxu0 %v1691
      %1867 = vmatprep.subr.mxu0 0.0
      %1868 = vmatpush1.msra.mxu0 0.0
      %1869 = vmatprep.subr.mxu0 0.0
      %1870 = vmatpush1.msra.mxu0 0.0
      %1871 = vmatprep.subr.mxu0 0.0
      %1872 = vmatpush1.msra.mxu0 0.0
      %1873 = vmatprep.subr.mxu0 0.0
      %1874 = vmatpush1.msra.mxu0 0.0
      %1875 = vmatprep.subr.mxu0 0.0
      %1876 = vmatpush1.msra.mxu0 0.0
      %1877 = vmatprep.subr.mxu0 0.0
      %1878 = vmatpush1.msra.mxu0 0.0
      %1879 = vmatprep.subr.mxu0 0.0
      %1880 = vmatpush1.msra.mxu0 0.0
      %1881 = vmatprep.subr.mxu0 0.0
      %1882 = vmatpush1.msra.mxu0 0.0
      %1883 = vmatprep.subr.mxu0 0.0
      %1884 = vmatpush1.msra.mxu0 0.0
      %1885 = vmatprep.subr.mxu0 0.0
      %1886 = vmatpush1.msra.mxu0 0.0
      %1887 = vmatprep.subr.mxu0 0.0
      %1888 = vmatpush1.msra.mxu0 0.0
      %1889 = vmatprep.subr.mxu0 0.0
      %1890 = vmatpush1.msra.mxu0 0.0
      %1891 = vmatprep.subr.mxu0 0.0
      %1892 = vmatpush1.msra.mxu0 0.0
      %1893 = vmatprep.subr.mxu0 0.0
      %1894 = vmatpush1.msra.mxu0 0.0
      %1895 = vmatprep.subr.mxu0 0.0
      %1896 = vmatpush1.msra.mxu0 0.0
      %1897 = vmatprep.subr.mxu0 0.0
      %1898 = vmatpush1.msra.mxu0 0.0
      %1899 = vmatprep.subr.mxu0 0.0
      %1900 = vmatpush1.msra.mxu0 0.0
      %1901 = vmatprep.subr.mxu0 0.0
      %1902 = vmatpush1.msra.mxu0 0.0
      %1903 = vmatprep.subr.mxu0 0.0
      %1904 = vmatpush1.msra.mxu0 0.0
      %1905 = vmatprep.subr.mxu0 0.0
      %1906 = vmatpush1.msra.mxu0 0.0
      %1907 = vmatprep.subr.mxu0 0.0
      %1908 = vmatpush1.msra.mxu0 0.0
      %1909 = vmatprep.subr.mxu0 0.0
      %1910 = vmatpush1.msra.mxu0 0.0
      %1911 = vmatprep.subr.mxu0 0.0
      %1912 = vmatpush1.msra.mxu0 0.0
      %1913 = vmatprep.subr.mxu0 0.0
      %1914 = vmatpush1.msra.mxu0 0.0
      %1915 = vmatprep.subr.mxu0 0.0
      %1916 = vmatpush1.msra.mxu0 0.0
      %1917 = vmatprep.subr.mxu0 0.0
      %1918 = vmatpush1.msra.mxu0 0.0
      %1919 = vmatprep.subr.mxu0 0.0
      %1920 = vmatpush1.msra.mxu0 0.0
      %1921 = vmatprep.subr.mxu0 0.0
      %1922 = vmatpush1.msra.mxu0 0.0
      %1923 = vmatprep.subr.mxu0 0.0
      %1924 = vmatpush1.msra.mxu0 0.0
      %1925 = vmatprep.subr.mxu0 0.0
      %1926 = vmatpush1.msra.mxu0 0.0
      %1927 = vmatprep.mubr.f32.mxu0 0.0
      %1928 = vmatmul.mubr.f32.gmra.mrb[0].mxu0 %v501
      %v1929 = vpop.f32.mrb[0].mxu0
      %v1930 = vadd.f32 0.0, %v1929
      %v1931 = vpop.f32.mrb[0].mxu0
      %1932 = vmatprep.mubr.f32.mxu0 0.0
      %1933 = vmatmul.mubr.f32.gmra.mrb[0].mxu0 %v504
      %v1934 = vpop.f32.mrb[0].mxu0
      %v1935 = vadd.f32 0.0, %v1934
      %v1936 = vpop.f32.mrb[0].mxu0
      %1937 = vdwg.mxu0
      %v1938 = vmul.f32 %v1855, 2.0
      %v1939 = vmul.f32 %v1860, 2.0
      %v1940 = vmul.f32 %v1930, 2.0
      %v1941 = vmul.f32 %v1935, 2.0
      %v1942 = vsub.f32 %v1938, %v1450
      %v1943 = vsub.f32 %v1939, %v1451
      %v1944 = vsub.f32 %v1940, %v1452
      %v1945 = vsub.f32 %v1941, %v1453
      %s1946 = scalar_lea.vmem %s6, 64
      %v1947 = vld [vmem:[%s1946] sm:$0xf]
      %v1948 = vld [vmem:[%s1946 + $0x4] sm:$0xf]
      %v1949 = vld [vmem:[%s1946 + $0x8] sm:$0xf]
      %v1950 = vld [vmem:[%s1946 + $0xc] sm:$0xf]
      %v1951 = vld [vmem:[%s1946 + $0x10] sm:$0xf]
      %v1952 = vld [vmem:[%s1946 + $0x14] sm:$0xf]
      %v1953 = vld [vmem:[%s1946 + $0x18] sm:$0xf]
      %v1954 = vld [vmem:[%s1946 + $0x1c] sm:$0xf]
      %v1955 = vpack.c.bf16 %v1943, %v1942
      %v1956 = vpack.c.bf16 %v1945, %v1944
      %v1965 = vunpack.c.l.b16 %v1947
      %v1966 = vunpack.c.l.b16 %v1948
      %v1967 = vunpack.c.l.b16 %v1949
      %v1968 = vunpack.c.l.b16 %v1950
      %v1969 = vunpack.c.l.b16 %v1951
      %v1970 = vunpack.c.l.b16 %v1952
      %v1971 = vunpack.c.l.b16 %v1953
      %v1972 = vunpack.c.l.b16 %v1954
      %v1973 = vpack.c.b16 %v1966, %v1965
      %v1974 = vpack.c.b16 %v1968, %v1967
      %v1975 = vpack.c.b16 %v1970, %v1969
      %v1976 = vpack.c.b16 %v1972, %v1971
      %v1982 = vsel %vm1488, %v1955, 0
      %v1985 = vsel %vm1488, %v1956, 0
      %1987 = vmatprep.subr.bf16.mxu0 0
      %1988 = vmatpush1.bf16.msra.mxu0 %v1973
      %1989 = vmatprep.subr.bf16.mxu0 0
      %1990 = vmatpush1.bf16.msra.mxu0 %v1974
      %1991 = vmatprep.subr.bf16.mxu0 0
      %1992 = vmatpush1.bf16.msra.mxu0 %v1975
      %1993 = vmatprep.subr.bf16.mxu0 0
      %1994 = vmatpush1.bf16.msra.mxu0 %v1976
      %1995 = vmatprep.subr.bf16.mxu0 0
      %1996 = vmatpush1.bf16.msra.mxu0 0
      %1997 = vmatprep.subr.bf16.mxu0 0
      %1998 = vmatpush1.bf16.msra.mxu0 0
      %1999 = vmatprep.subr.bf16.mxu0 0
      %2000 = vmatpush1.bf16.msra.mxu0 0
      %2001 = vmatprep.subr.bf16.mxu0 0
      %2002 = vmatpush1.bf16.msra.mxu0 0
      %2003 = vmatprep.subr.bf16.mxu0 0
      %2004 = vmatpush1.bf16.msra.mxu0 0
      %2005 = vmatprep.subr.bf16.mxu0 0
      %2006 = vmatpush1.bf16.msra.mxu0 0
      %2007 = vmatprep.subr.bf16.mxu0 0
      %2008 = vmatpush1.bf16.msra.mxu0 0
      %2009 = vmatprep.subr.bf16.mxu0 0
      %2010 = vmatpush1.bf16.msra.mxu0 0
      %2011 = vmatprep.subr.bf16.mxu0 0
      %2012 = vmatpush1.bf16.msra.mxu0 0
      %2013 = vmatprep.subr.bf16.mxu0 0
      %2014 = vmatpush1.bf16.msra.mxu0 0
      %2015 = vmatprep.subr.bf16.mxu0 0
      %2016 = vmatpush1.bf16.msra.mxu0 0
      %2017 = vmatprep.subr.bf16.mxu0 0
      %2018 = vmatpush1.bf16.msra.mxu0 0
      %2019 = vmatprep.mubr.bf16.mxu0 0
      %2020 = vmatmul.mubr.bf16.gmra.mrb[0].mxu0 %v1982
      %v2021 = vpop.f32.mrb[0].mxu0
      %v2022 = vadd.f32 0.0, %v2021
      %v2023 = vpop.f32.mrb[0].mxu0
      %v2024 = vpop.f32.mrb[0].mxu0
      %v2025 = vadd.f32 0.0, %v2024
      %v2026 = vpop.f32.mrb[0].mxu0
      %2027 = vmatprep.mubr.bf16.mxu0 0
      %2028 = vmatmul.mubr.bf16.gmra.mrb[0].mxu0 %v1985
      %v2029 = vpop.f32.mrb[0].mxu0
      %v2030 = vadd.f32 0.0, %v2029
      %v2031 = vpop.f32.mrb[0].mxu0
      %v2032 = vpop.f32.mrb[0].mxu0
      %v2033 = vadd.f32 0.0, %v2032
      %v2034 = vpop.f32.mrb[0].mxu0
      %2035 = vdwg.mxu0
      %v2036 = vadd.f32 %v1784, %v2022
      %v2037 = vadd.f32 %v1785, %v2025
      %v2038 = vadd.f32 %v1786, %v2030
      %v2039 = vadd.f32 %v1787, %v2033
      %v2040 = vld [vmem:[%s7] sm:$0x1]
      %v2042 = vlaneseq
      %v2043 = vshrl.u32 %v2042, 7
      %v2044 = vsub.s32 0, %v2043
      %v2045 = vrot.slane %v2040, %v2044
      %v2047 = vadd.f32 %v2036, %v2045
      %v2048 = vadd.f32 %v2037, %v2045
      %v2049 = vadd.f32 %v2038, %v2045
      %v2050 = vadd.f32 %v2039, %v2045
      %v2051 = vadd.f32 %v2047, %v2048
      %v2052 = vrot.slane %v2051, 4
      %v2053 = vadd.f32 %v2051, %v2052
      %v2054 = vrot.slane %v2053, 2
      %v2055 = vadd.f32 %v2053, %v2054
      %v2056 = vrot.slane %v2055, 1
      %v2057 = vadd.f32 %v2055, %v2056
      %v2058 = vadd.f32 %v2049, %v2050
      %v2059 = vrot.slane %v2058, 4
      %v2060 = vadd.f32 %v2058, %v2059
      %v2061 = vrot.slane %v2060, 2
      %v2062 = vadd.f32 %v2060, %v2061
      %v2063 = vrot.slane %v2062, 1
      %v2064 = vadd.f32 %v2062, %v2063
      %2065 = vst [vmem:[%s333] sm:$0x1] %v2057
      %2066 = vst [vmem:[%s333 + $0x1] sm:$0x1] %v2064
      %s2067 = smul.u32 2, %s19
      %p2068 = scmp.lt.s32.totalorder %s2067, 3
      %s2069 = scalar_select %p2068, %s2067, 3
      %s2070 = scalar_lea.vmem %s8, %s2069
      // Predicated region
      $region53: #{_lambda_.2} parent=51 // pred_check
        %p2071 = pneg %p215
      $region54: #{_lambda_.2} parent=51 // pred_check_branch
        %2073 = sbr.rel (%p2071) target = $region56
      $region55: #{_lambda_.2} parent=51 // pred_region
        %s2074 = smul.u32 2, %s19
      $region56: #{_lambda_.2} parent=51 // pred_fallthru
        _
    $region52: #{_lambda_.2} parent=5 // pred_fallthru
      _
    %p2075 = scmp.le.s32.totalorder 2, %s14
    // Predicated region
    $region57: #{_lambda_.2} parent=5 // pred_check
      %p2076 = pneg %p2075
    $region58: #{_lambda_.2} parent=5 // pred_check_branch
      %2078 = sbr.rel (%p2076) target = $region60
    $region59: #{_lambda_.2} parent=5 // pred_region
      %s2079 = ssub.s32 %s14, 2
      // Predicated region
      $region61: #{_lambda_.2} parent=59 // pred_check
        %p2080 = pneg %p221
      $region62: #{_lambda_.2} parent=59 // pred_check_branch
        %2082 = sbr.rel (%p2080) target = $region64
      $region63: #{_lambda_.2} parent=59 // pred_region
        %s2083 = smul.u32 2, %s20
        %p2084 = scmp.lt.s32.totalorder %s2083, 3
        %s2085 = scalar_select %p2084, %s2083, 3
        %s2086 = scalar_lea.vmem %s8, %s2085
      $region64: #{_lambda_.2} parent=59 // pred_fallthru
        _
    $region60: #{_lambda_.2} parent=5 // pred_fallthru
      _
  $region6: #{_lambda_.2} parent=0 // loop_footer
    %s18 = sadd.s32 1, %s14
  $region7: #{_lambda_.2} parent=0 // loop_footer_branch
    %13 = sbr.rel target = $region3
  $region8: #{_lambda_.2} parent=0 // loop_exit
    _

</llo_original>
